<compile_context>
chip_gen: v5e
topology: v5e:2x2
jax: 0.10.0
libtpu: 0.0.40
codegen_flags: <defaults>
</compile_context>

<pallas_src>
import math

import jax
import jax.numpy as jnp
from jax.experimental import pallas as pl
from jax.experimental.pallas import tpu as pltpu

_TCO = 128                       # Cout tile (lane-dense, full MXU N)
_VMEM_BUDGET_BYTES = 8 * 1024 * 1024


def _round_up(x, m):
    return ((x + m - 1) // m) * m


def _choose_row_tile(h, w, cin_p, tco):
    """Largest divisor TH of H whose per-grid-step working set fits the budget."""
    best = 1
    for th in range(1, h + 1):
        if h % th:
            continue
        x_tile = 2 * (th + 2) * (w + 2) * cin_p * 2    # bf16 input slab, double-buffered
        out_tile = 2 * th * w * tco * 4                # f32 output block, double-buffered
        patch = th * w * 9 * cin_p * 2                 # bf16 im2col patch (value)
        acc = th * w * tco * 4                         # f32 matmul result / epilogue
        if x_tile + out_tile + patch + acc <= _VMEM_BUDGET_BYTES:
            best = th
    return best


def _conv2_bn_silu_kernel(x_ref, w_ref, scale_ref, bias_ref, o_ref):
    """Fused 3x3 conv (+folded 1x1) + BatchNorm + SiLU for one row/Cout tile.

    x_ref:     (TH+2, W+2, Cin_p)   bf16 halo'd NHWC row slab
    w_ref:     (9*Cin_p, TCO)       bf16 im2col weights for this Cout tile
    scale_ref: (1, TCO)             f32 folded BN scale
    bias_ref:  (1, TCO)             f32 folded BN bias
    o_ref:     (TH, W, TCO)
    """
    th, w_out, tco = o_ref.shape
    cin_p = x_ref.shape[-1]

    x = x_ref[...]
    # im2col: the nine shifted taps are packed once along the channel axis so
    # the whole conv is ONE matmul with K = 9*Cin (instead of 9 K=Cin passes).
    pieces = [x[ky:ky + th, kx:kx + w_out, :] for ky in range(3) for kx in range(3)]
    patch = jnp.concatenate(pieces, axis=-1).reshape(th * w_out, 9 * cin_p)

    # bf16 MXU operands, f32 accumulation.
    acc = jnp.dot(patch, w_ref[...], preferred_element_type=jnp.float32)

    # Folded BatchNorm + SiLU epilogue in f32; reciprocal on the EUP slot.
    y = acc * scale_ref[...] + bias_ref[...]
    y = y * pl.reciprocal(1.0 + jnp.exp(-y), approx=True)
    o_ref[...] = y.reshape(th, w_out, tco).astype(o_ref.dtype)


def conv2_forward(x, w3, w1, gamma, beta, mean, var, eps=1e-5):
    """Conv2.forward (inference): SiLU(BN(conv3x3(x) + conv1x1(x))). x is NCHW."""
    B, cin, H, W = x.shape
    cout = w3.shape[0]

    # Fold cv2 (1x1, pad 0) into the 3x3 centre tap (== Conv2.fuse_convs) and
    # fold inference BatchNorm into per-channel scale / bias.
    wf = w3.at[:, :, 1, 1].add(w1[:, :, 0, 0])                  # (Cout, Cin, 3, 3)
    scale = (gamma * jax.lax.rsqrt(var + eps)).astype(jnp.float32)
    bias = (beta - mean * scale).astype(jnp.float32)

    cin_p = _round_up(cin, 8)           # sublane-friendly K chunks
    cout_p = _round_up(cout, _TCO)      # lane-dense output / full MXU N
    n_co = cout_p // _TCO

    # Weights in im2col layout (9*Cin_p, Cout_p), bf16 MXU operands.
    w_hwio = jnp.transpose(wf, (2, 3, 1, 0))                    # (3, 3, Cin, Cout)
    w_hwio = jnp.pad(w_hwio, ((0, 0), (0, 0), (0, cin_p - cin), (0, cout_p - cout)))
    w_k = w_hwio.reshape(9 * cin_p, cout_p).astype(jnp.bfloat16)

    scale_p = jnp.pad(scale, (0, cout_p - cout)).reshape(1, cout_p)
    bias_p = jnp.pad(bias, (0, cout_p - cout)).reshape(1, cout_p)

    th = _choose_row_tile(H, W, cin_p, _TCO)
    n_h = H // th

    # NHWC + 'same' halo pad + channel pad, bf16.  Each row tile carries its
    # own 2 halo rows (replicated once here) so every BlockSpec stays plain
    # Blocked (no overlapping blocks needed).
    # TODO(synk): with pl.Element / manual row DMA the halo replication (and
    # this wrapper copy) could be dropped entirely.
    x_nhwc = jnp.transpose(x, (0, 2, 3, 1)).astype(jnp.bfloat16)
    x_pad = jnp.pad(x_nhwc, ((0, 0), (1, 1), (1, 1), (0, cin_p - cin)))
    x_tiles = jnp.stack([x_pad[:, i * th:i * th + th + 2] for i in range(n_h)], axis=1)
    # -> (B, n_h, TH+2, W+2, Cin_p)

    out_tiled = pl.pallas_call(
        _conv2_bn_silu_kernel,
        out_shape=jax.ShapeDtypeStruct((B, n_h, th, W, cout_p), x.dtype),
        grid=(B, n_h, n_co),            # Cout innermost -> input slab stays resident
        in_specs=[
            pl.BlockSpec((None, None, th + 2, W + 2, cin_p),
                         lambda b, i, j: (b, i, 0, 0, 0)),
            pl.BlockSpec((9 * cin_p, _TCO), lambda b, i, j: (0, j)),
            pl.BlockSpec((1, _TCO), lambda b, i, j: (0, j)),
            pl.BlockSpec((1, _TCO), lambda b, i, j: (0, j)),
        ],
        out_specs=pl.BlockSpec((None, None, th, W, _TCO),
                               lambda b, i, j: (b, i, 0, 0, j)),
        compiler_params=pltpu.CompilerParams(
            # batch + row tiles can be split across v7x's two TensorCores.
            dimension_semantics=("parallel", "parallel", "arbitrary"),
            # explicit scoped-VMEM limit (raises v5e's 16 MiB default; safe on
            # v6e/v7x).  Tile sizes are budgeted to ~8 MiB so there is ample
            # headroom for double buffering on every generation.
            vmem_limit_bytes=32 * 1024 * 1024,
        ),
    )(x_tiles, w_k, scale_p, bias_p)

    out = out_tiled.reshape(B, H, W, cout_p)[..., :cout]
    return jnp.transpose(out, (0, 3, 1, 2))


class Conv2Pallas:
    """Inference-mode JAX/Pallas equivalent of ultralytics Conv2."""

    def __init__(self, c1, c2, k=3, s=1, p=None, g=1, d=1, act=True, *, key,
                 eps=1e-5):
        # TODO(synk): only the default Conv2 config (k=3, s=1, p=None, g=1, d=1,
        # act=SiLU) and inference-mode BatchNorm (running stats) are implemented.
        assert k == 3 and s == 1 and p is None and g == 1 and d == 1 and act is True
        self.eps = eps
        k3, k1, kg, kb, km, kv = jax.random.split(key, 6)
        b3 = 1.0 / math.sqrt(c1 * 9)
        b1 = 1.0 / math.sqrt(c1)
        self.w3 = jax.random.uniform(k3, (c2, c1, 3, 3), jnp.float32, -b3, b3)
        self.w1 = jax.random.uniform(k1, (c2, c1, 1, 1), jnp.float32, -b1, b1)
        # Non-trivial BN params/stats so the folding math is exercised.
        self.gamma = 1.0 + 0.1 * jax.random.normal(kg, (c2,), jnp.float32)
        self.beta = 0.1 * jax.random.normal(kb, (c2,), jnp.float32)
        self.mean = 0.1 * jax.random.normal(km, (c2,), jnp.float32)
        self.var = 1.0 + 0.1 * jnp.abs(jax.random.normal(kv, (c2,), jnp.float32))

    def __call__(self, x):
        return conv2_forward(x, self.w3, self.w1, self.gamma, self.beta,
                             self.mean, self.var, self.eps)


def _reference_forward(x, w3, w1, gamma, beta, mean, var, eps):
    """Pure-JAX/XLA reference for Conv2.forward (inference).

    Operands are quantised to bf16 (exactly what the kernel feeds the MXU) so
    the comparison isolates indexing/fusion errors from expected precision loss.
    """
    wf = w3.at[:, :, 1, 1].add(w1[:, :, 0, 0])      # same fold as the kernel
    xq = x.astype(jnp.bfloat16).astype(jnp.float32)
    wq = wf.astype(jnp.bfloat16).astype(jnp.float32)
    dn = ("NCHW", "OIHW", "NCHW")
    y = jax.lax.conv_general_dilated(xq, wq, (1, 1), ((1, 1), (1, 1)),
                                     dimension_numbers=dn)
    s = gamma / jnp.sqrt(var + eps)
    b = beta - mean * s
    y = y * s[None, :, None, None] + b[None, :, None, None]
    return y * jax.nn.sigmoid(y)


if __name__ == "__main__":
    key = jax.random.PRNGKey(0)
    kx, kp = jax.random.split(key)
    B, C1, C2, H, W = 2, 4, 8, 16, 16
    x = jax.random.normal(kx, (B, C1, H, W), dtype=jnp.float32)

    mod = Conv2Pallas(C1, C2, key=kp)
    fwd = jax.jit(mod.__call__)
    out = jax.block_until_ready(fwd(x))

    ref = _reference_forward(x, mod.w3, mod.w1, mod.gamma, mod.beta,
                             mod.mean, mod.var, mod.eps)
    assert out.shape == (B, C2, H, W)
    # Tolerance covers the approximate EUP reciprocal in the SiLU epilogue.
    err = float(jnp.max(jnp.abs(out - ref)))
    assert jnp.allclose(out, ref, atol=1e-2, rtol=1e-2), err
    print("KERNEL_OK")
</pallas_src>

<mosaic_0001>
module attributes {stable_mosaic.version = 11 : i64} {
  func.func @_conv2_bn_silu_kernel(%arg0: i32, %arg1: i32, %arg2: i32, %arg3: memref<1x1x18x18x8xbf16, #tpu.memory_space<vmem>>, %arg4: memref<72x128xbf16, #tpu.memory_space<vmem>>, %arg5: memref<1x128xf32, #tpu.memory_space<vmem>>, %arg6: memref<1x128xf32, #tpu.memory_space<vmem>>, %arg7: memref<1x1x16x16x128xf32, #tpu.memory_space<vmem>>) attributes {dimension_semantics = [#tpu.dimension_semantics<parallel>, #tpu.dimension_semantics<parallel>, #tpu.dimension_semantics<arbitrary>], iteration_bounds = array<i64: 2, 1, 1>, scalar_prefetch = 0 : i64, scratch_operands = 0 : i64, tpu.core_type = #tpu.core_type<tc>, window_params = [{transform_indices = @transform_0, window_bounds = array<i64: 1, 1, 18, 18, 8>}, {transform_indices = @transform_1, window_bounds = array<i64: 72, 128>}, {transform_indices = @transform_2, window_bounds = array<i64: 1, 128>}, {transform_indices = @transform_3, window_bounds = array<i64: 1, 128>}, {transform_indices = @transform_4, window_bounds = array<i64: 1, 1, 16, 16, 128>}]} {
    %c0 = arith.constant 0 : index
    %c0_0 = arith.constant 0 : index
    %c0_1 = arith.constant 0 : index
    %c0_2 = arith.constant 0 : index
    %c0_3 = arith.constant 0 : index
    %0 = vector.load %arg3[%c0, %c0_0, %c0_1, %c0_2, %c0_3] : memref<1x1x18x18x8xbf16, #tpu.memory_space<vmem>>, vector<1x1x18x18x8xbf16>
    %1 = vector.shape_cast %0 : vector<1x1x18x18x8xbf16> to vector<18x18x8xbf16>
    %2 = vector.extract_strided_slice %1 {offsets = [0, 0, 0], sizes = [16, 16, 8], strides = [1, 1, 1]} : vector<18x18x8xbf16> to vector<16x16x8xbf16>
    %3 = vector.extract_strided_slice %1 {offsets = [0, 1, 0], sizes = [16, 16, 8], strides = [1, 1, 1]} : vector<18x18x8xbf16> to vector<16x16x8xbf16>
    %4 = vector.extract_strided_slice %1 {offsets = [0, 2, 0], sizes = [16, 16, 8], strides = [1, 1, 1]} : vector<18x18x8xbf16> to vector<16x16x8xbf16>
    %5 = vector.extract_strided_slice %1 {offsets = [1, 0, 0], sizes = [16, 16, 8], strides = [1, 1, 1]} : vector<18x18x8xbf16> to vector<16x16x8xbf16>
    %6 = vector.extract_strided_slice %1 {offsets = [1, 1, 0], sizes = [16, 16, 8], strides = [1, 1, 1]} : vector<18x18x8xbf16> to vector<16x16x8xbf16>
    %7 = vector.extract_strided_slice %1 {offsets = [1, 2, 0], sizes = [16, 16, 8], strides = [1, 1, 1]} : vector<18x18x8xbf16> to vector<16x16x8xbf16>
    %8 = vector.extract_strided_slice %1 {offsets = [2, 0, 0], sizes = [16, 16, 8], strides = [1, 1, 1]} : vector<18x18x8xbf16> to vector<16x16x8xbf16>
    %9 = vector.extract_strided_slice %1 {offsets = [2, 1, 0], sizes = [16, 16, 8], strides = [1, 1, 1]} : vector<18x18x8xbf16> to vector<16x16x8xbf16>
    %10 = vector.extract_strided_slice %1 {offsets = [2, 2, 0], sizes = [16, 16, 8], strides = [1, 1, 1]} : vector<18x18x8xbf16> to vector<16x16x8xbf16>
    %11 = tpu.concatenate %2, %3, %4, %5, %6, %7, %8, %9, %10 in 2 : vector<16x16x8xbf16>, vector<16x16x8xbf16>, vector<16x16x8xbf16>, vector<16x16x8xbf16>, vector<16x16x8xbf16>, vector<16x16x8xbf16>, vector<16x16x8xbf16>, vector<16x16x8xbf16>, vector<16x16x8xbf16> -> vector<16x16x72xbf16>
    %12 = vector.shape_cast %11 : vector<16x16x72xbf16> to vector<256x72xbf16>
    %c0_4 = arith.constant 0 : index
    %c0_5 = arith.constant 0 : index
    %13 = vector.load %arg4[%c0_4, %c0_5] : memref<72x128xbf16, #tpu.memory_space<vmem>>, vector<72x128xbf16>
    %cst = arith.constant dense<0.000000e+00> : vector<256x128xf32>
    %14 = tpu.matmul %12, %13, %cst {dimension_numbers = #tpu.dot_dimension_numbers<[1], [0], [0], [1], [0, 0, 1, 1], [], []>} : vector<256x72xbf16>, vector<72x128xbf16>, vector<256x128xf32> -> vector<256x128xf32>
    %c0_6 = arith.constant 0 : index
    %c0_7 = arith.constant 0 : index
    %15 = vector.load %arg5[%c0_6, %c0_7] : memref<1x128xf32, #tpu.memory_space<vmem>>, vector<1x128xf32>
    %16 = vector.broadcast %15 : vector<1x128xf32> to vector<256x128xf32>
    %17 = arith.mulf %14, %16 : vector<256x128xf32>
    %c0_8 = arith.constant 0 : index
    %c0_9 = arith.constant 0 : index
    %18 = vector.load %arg6[%c0_8, %c0_9] : memref<1x128xf32, #tpu.memory_space<vmem>>, vector<1x128xf32>
    %19 = vector.broadcast %18 : vector<1x128xf32> to vector<256x128xf32>
    %20 = arith.addf %17, %19 : vector<256x128xf32>
    %cst_10 = arith.constant 0.000000e+00 : f32
    %21 = vector.broadcast %cst_10 : f32 to vector<256x128xf32>
    %22 = arith.subf %21, %20 : vector<256x128xf32>
    %23 = math.exp %22 : vector<256x128xf32>
    %cst_11 = arith.constant 1.000000e+00 : f32
    %24 = vector.broadcast %cst_11 : f32 to vector<256x128xf32>
    %25 = arith.addf %24, %23 : vector<256x128xf32>
    %26 = tpu.reciprocal %25 {approx = true} : vector<256x128xf32> -> vector<256x128xf32>
    %27 = arith.mulf %20, %26 : vector<256x128xf32>
    %28 = vector.shape_cast %27 : vector<256x128xf32> to vector<16x16x128xf32>
    %c0_12 = arith.constant 0 : index
    %c0_13 = arith.constant 0 : index
    %c0_14 = arith.constant 0 : index
    %c0_15 = arith.constant 0 : index
    %c0_16 = arith.constant 0 : index
    %29 = vector.load %arg7[%c0_12, %c0_13, %c0_14, %c0_15, %c0_16] : memref<1x1x16x16x128xf32, #tpu.memory_space<vmem>>, vector<1x1x16x16x128xf32>
    %30 = vector.shape_cast %29 : vector<1x1x16x16x128xf32> to vector<16x16x128xf32>
    %31 = vector.shape_cast %28 : vector<16x16x128xf32> to vector<1x1x16x16x128xf32>
    tpu.vector_store %arg7[%c0_12, %c0_13, %c0_14, %c0_15, %c0_16], %31 {strides = array<i32>} : memref<1x1x16x16x128xf32, #tpu.memory_space<vmem>>, vector<1x1x16x16x128xf32>,
    return
  }
  func.func @transform_0(%arg0: i32, %arg1: i32, %arg2: i32) -> (i32, i32, i32, i32, i32) {
    %c0_i32 = arith.constant 0 : i32
    %c0_i32_0 = arith.constant 0 : i32
    %c0_i32_1 = arith.constant 0 : i32
    %c0_i32_2 = arith.constant 0 : i32
    return %arg0, %arg1, %c0_i32, %c0_i32_0, %c0_i32_1 : i32, i32, i32, i32, i32
  }
  func.func @transform_1(%arg0: i32, %arg1: i32, %arg2: i32) -> (i32, i32) {
    %c0_i32 = arith.constant 0 : i32
    %c0_i32_0 = arith.constant 0 : i32
    return %c0_i32, %arg2 : i32, i32
  }
  func.func @transform_2(%arg0: i32, %arg1: i32, %arg2: i32) -> (i32, i32) {
    %c0_i32 = arith.constant 0 : i32
    %c0_i32_0 = arith.constant 0 : i32
    return %c0_i32, %arg2 : i32, i32
  }
  func.func @transform_3(%arg0: i32, %arg1: i32, %arg2: i32) -> (i32, i32) {
    %c0_i32 = arith.constant 0 : i32
    %c0_i32_0 = arith.constant 0 : i32
    return %c0_i32, %arg2 : i32, i32
  }
  func.func @transform_4(%arg0: i32, %arg1: i32, %arg2: i32) -> (i32, i32, i32, i32, i32) {
    %c0_i32 = arith.constant 0 : i32
    %c0_i32_0 = arith.constant 0 : i32
    %c0_i32_1 = arith.constant 0 : i32
    return %arg0, %arg1, %c0_i32, %c0_i32_0, %arg2 : i32, i32, i32, i32, i32
  }
}

</mosaic_0001>

<llo_original>
// kernel: a_call__.1
$region0: #{a_call__.1}
  #allocation0 [shape = 'u32[]', space=smem, size = 0x4, offset = 0x4, fixed_abs, tag = 'smem constant byte address 0x4 - core index']
  #allocation1 [shape = 'u32[72,128]{1,0:T(1,128)}', space=vmem, size = 0x9000, scoped, tag = 'internal scratch']
  %s0 = inlined_call_operand.vmem [shape: bf16[2,1,18,18,8], index: 0, kind: input, shape index: {}]
  %s1 = inlined_call_operand.vmem [shape: bf16[72,128], index: 1, kind: input, shape index: {}]
  %s2 = inlined_call_operand.vmem [shape: f32[1,128], index: 2, kind: input, shape index: {}]
  %s3 = inlined_call_operand.vmem [shape: f32[1,128], index: 3, kind: input, shape index: {}]
  %s4 = inlined_call_operand.vmem [shape: f32[2,1,16,16,128], index: 4, kind: output, shape index: {}]
  %s5 = sld [smem:[#allocation0]]
  $region49: #{a_call__.1} parent=0
    _
  %s7 = ssub.s32 1, %s5
  %s8 = scalar_select 0, %s7, %s5
  loop: start=0, step=1, limit=4
  $region2: #{a_call__.1} parent=0 // loop_pre_header
    _
  $region3: #{a_call__.1} parent=0 // loop_header
    %s10 = sphi 0, %s14
    %p11 = scmp.ge.s32.totalorder %s10, 4
    %s17 = sphi 0, %s36
    %s18 = sphi 0, %s32
    %s19 = sphi 0, %s28
    %s20 = sphi 0, %s17
    %s21 = sphi 0, %s18
    %s22 = sphi 0, %s19
    %s23 = sphi 0, %s20
    %s24 = sphi 0, %s21
    %s25 = sphi 0, %s22
    %s41 = sphi 0, %s43
    %s44 = sphi 0, %s41
    %s45 = sphi 0, %s44
    %s61 = sphi 0, %s45
    %s67 = sphi 0, %s69
    %s70 = sphi 0, %s67
    %s71 = sphi 0, %s70
    %s87 = sphi 0, %s71
    %s93 = sphi 0, %s95
    %s96 = sphi 0, %s93
    %s97 = sphi 0, %s96
    %s113 = sphi 0, %s97
    %s119 = sphi 0, %s121
    %s122 = sphi 0, %s119
    %s123 = sphi 0, %s122
    %s139 = sphi 0, %s123
    %s149 = sphi 0, %s151
    %s152 = sphi 0, %s149
    %s153 = sphi 0, %s152
    %s169 = sphi 0, %s153
  $region4: #{a_call__.1} parent=0 // loop_header_branch
    %13 = sbr.rel (%p11) target = $region8
  $region5: #{a_call__.1} parent=0 // loop_body
    %s15 = ssub.s32 %s10, 1
    %s16 = ssub.s32 %s10, 2
    %s26 = sadd.s32 1, %s19
    %p27 = scmp.ge.s32.totalorder %s26, 1
    %s28 = scalar_select %p27, 0, %s26
    %s29 = sadd.s32 1, %s18
    %s30 = scalar_select %p27, %s29, %s18
    %p31 = scmp.ge.s32.totalorder %s30, 1
    %s32 = scalar_select %p31, 0, %s30
    %s33 = sadd.s32 1, %s17
    %s34 = scalar_select %p31, %s33, %s17
    %p35 = scmp.ge.s32.totalorder %s34, 2
    %s36 = scalar_select %p35, 0, %s34
    %s37 = ssub.s32 %s17, %s36
    %s38 = ssub.s32 %s18, %s32
    %s39 = sor.u32 %s37, %s38
    %p40 = scmp.eq.s32.totalorder %s39, 0
    %s42 = sadd.s32 %s41, 1
    %s43 = scalar_select %p40, %s41, %s42
    %p46 = pneg %p40
    %p47 = scmp.eq.s32.totalorder %s10, 1
    %p48 = por %p46, %p47
    %p49 = scmp.ne.s32.totalorder %s41, %s44
    %p50 = scmp.eq.s32.totalorder %s10, 0
    %p51 = por %p49, %p50
    %p52 = scmp.ne.s32.totalorder %s41, %s44
    %p53 = scmp.eq.s32.totalorder %s15, 1
    %p54 = por %p52, %p53
    %p55 = scmp.ne.s32.totalorder %s44, %s45
    %p56 = scmp.eq.s32.totalorder %s15, 0
    %p57 = por %p55, %p56
    %p58 = scmp.ne.s32.totalorder %s44, %s45
    %p59 = scmp.eq.s32.totalorder %s16, 1
    %p60 = por %p58, %p59
    %p62 = scmp.ne.s32.totalorder %s45, %s61
    %p63 = scmp.eq.s32.totalorder %s16, 0
    %p64 = por %p62, %p63
    %s65 = ssub.s32 %s19, %s28
    %p66 = scmp.eq.s32.totalorder %s65, 0
    %s68 = sadd.s32 %s67, 1
    %s69 = scalar_select %p66, %s67, %s68
    %p72 = pneg %p66
    %p73 = scmp.eq.s32.totalorder %s10, 1
    %p74 = por %p72, %p73
    %p75 = scmp.ne.s32.totalorder %s67, %s70
    %p76 = scmp.eq.s32.totalorder %s10, 0
    %p77 = por %p75, %p76
    %p78 = scmp.ne.s32.totalorder %s67, %s70
    %p79 = scmp.eq.s32.totalorder %s15, 1
    %p80 = por %p78, %p79
    %p81 = scmp.ne.s32.totalorder %s70, %s71
    %p82 = scmp.eq.s32.totalorder %s15, 0
    %p83 = por %p81, %p82
    %p84 = scmp.ne.s32.totalorder %s70, %s71
    %p85 = scmp.eq.s32.totalorder %s16, 1
    %p86 = por %p84, %p85
    %p88 = scmp.ne.s32.totalorder %s71, %s87
    %p89 = scmp.eq.s32.totalorder %s16, 0
    %p90 = por %p88, %p89
    %s91 = ssub.s32 %s19, %s28
    %p92 = scmp.eq.s32.totalorder %s91, 0
    %s94 = sadd.s32 %s93, 1
    %s95 = scalar_select %p92, %s93, %s94
    %p98 = pneg %p92
    %p99 = scmp.eq.s32.totalorder %s10, 1
    %p100 = por %p98, %p99
    %p101 = scmp.ne.s32.totalorder %s93, %s96
    %p102 = scmp.eq.s32.totalorder %s10, 0
    %p103 = por %p101, %p102
    %p104 = scmp.ne.s32.totalorder %s93, %s96
    %p105 = scmp.eq.s32.totalorder %s15, 1
    %p106 = por %p104, %p105
    %p107 = scmp.ne.s32.totalorder %s96, %s97
    %p108 = scmp.eq.s32.totalorder %s15, 0
    %p109 = por %p107, %p108
    %p110 = scmp.ne.s32.totalorder %s96, %s97
    %p111 = scmp.eq.s32.totalorder %s16, 1
    %p112 = por %p110, %p111
    %p114 = scmp.ne.s32.totalorder %s97, %s113
    %p115 = scmp.eq.s32.totalorder %s16, 0
    %p116 = por %p114, %p115
    %s117 = ssub.s32 %s19, %s28
    %p118 = scmp.eq.s32.totalorder %s117, 0
    %s120 = sadd.s32 %s119, 1
    %s121 = scalar_select %p118, %s119, %s120
    %p124 = pneg %p118
    %p125 = scmp.eq.s32.totalorder %s10, 1
    %p126 = por %p124, %p125
    %p127 = scmp.ne.s32.totalorder %s119, %s122
    %p128 = scmp.eq.s32.totalorder %s10, 0
    %p129 = por %p127, %p128
    %p130 = scmp.ne.s32.totalorder %s119, %s122
    %p131 = scmp.eq.s32.totalorder %s15, 1
    %p132 = por %p130, %p131
    %p133 = scmp.ne.s32.totalorder %s122, %s123
    %p134 = scmp.eq.s32.totalorder %s15, 0
    %p135 = por %p133, %p134
    %p136 = scmp.ne.s32.totalorder %s122, %s123
    %p137 = scmp.eq.s32.totalorder %s16, 1
    %p138 = por %p136, %p137
    %p140 = scmp.ne.s32.totalorder %s123, %s139
    %p141 = scmp.eq.s32.totalorder %s16, 0
    %p142 = por %p140, %p141
    %s143 = ssub.s32 %s17, %s36
    %s144 = ssub.s32 %s18, %s32
    %s145 = sor.u32 %s143, %s144
    %s146 = ssub.s32 %s19, %s28
    %s147 = sor.u32 %s145, %s146
    %p148 = scmp.eq.s32.totalorder %s147, 0
    %s150 = sadd.s32 %s149, 1
    %s151 = scalar_select %p148, %s149, %s150
    %p154 = pneg %p148
    %p155 = scmp.eq.s32.totalorder %s10, 1
    %p156 = por %p154, %p155
    %p157 = scmp.ne.s32.totalorder %s149, %s152
    %p158 = scmp.eq.s32.totalorder %s10, 0
    %p159 = por %p157, %p158
    %p160 = scmp.ne.s32.totalorder %s149, %s152
    %p161 = scmp.eq.s32.totalorder %s15, 1
    %p162 = por %p160, %p161
    %p163 = scmp.ne.s32.totalorder %s152, %s153
    %p164 = scmp.eq.s32.totalorder %s15, 0
    %p165 = por %p163, %p164
    %p166 = scmp.ne.s32.totalorder %s152, %s153
    %p167 = scmp.eq.s32.totalorder %s16, 1
    %p168 = por %p166, %p167
    %p170 = scmp.ne.s32.totalorder %s153, %s169
    %p171 = scmp.eq.s32.totalorder %s16, 0
    %p172 = por %p170, %p171
    %p173 = scmp.le.s32.totalorder 1, %s10
    %p174 = scmp.lt.s32.totalorder %s10, 3
    %p175 = pnand %p173, %p174
    %p176 = pneg %p175
    // Predicated region
    $region9: #{a_call__.1} parent=5 // pred_check
      _
    $region10: #{a_call__.1} parent=5 // pred_check_branch
      %178 = sbr.rel (%p175) target = $region12
    $region11: #{a_call__.1} parent=5 // pred_region
      %s179 = ssub.s32 %s10, 1
      // Predicated region
      $region13: #{a_call__.1} parent=11 // pred_check
        %p180 = pneg %p83
      $region14: #{a_call__.1} parent=11 // pred_check_branch
        %182 = sbr.rel (%p180) target = $region16
      $region15: #{a_call__.1} parent=11 // pred_region
        %p183 = scmp.lt.s32.totalorder %s22, 0
        %s184 = scalar_select %p183, %s22, 0
        %s185 = smul.addr %s184, 4
        %s186 = scalar_lea.vmem %s1, %s185
      $region16: #{a_call__.1} parent=11 // pred_fallthru
        _
      // Predicated region
      $region17: #{a_call__.1} parent=11 // pred_check
        %p187 = pneg %p109
      $region18: #{a_call__.1} parent=11 // pred_check_branch
        %189 = sbr.rel (%p187) target = $region20
      $region19: #{a_call__.1} parent=11 // pred_region
        %p190 = scmp.lt.s32.totalorder %s22, 0
        %s191 = scalar_select %p190, %s22, 0
        %s192 = scalar_lea.vmem %s2, %s191
      $region20: #{a_call__.1} parent=11 // pred_fallthru
        _
      // Predicated region
      $region21: #{a_call__.1} parent=11 // pred_check
        %p193 = pneg %p135
      $region22: #{a_call__.1} parent=11 // pred_check_branch
        %195 = sbr.rel (%p193) target = $region24
      $region23: #{a_call__.1} parent=11 // pred_region
        %p196 = scmp.lt.s32.totalorder %s22, 0
        %s197 = scalar_select %p196, %s22, 0
        %s198 = scalar_lea.vmem %s3, %s197
      $region24: #{a_call__.1} parent=11 // pred_fallthru
        _
    $region12: #{a_call__.1} parent=5 // pred_fallthru
      _
    %p199 = scmp.lt.s32.totalorder %s10, 2
    // Predicated region
    $region25: #{a_call__.1} parent=5 // pred_check
      %p200 = pneg %p199
    $region26: #{a_call__.1} parent=5 // pred_check_branch
      %202 = sbr.rel (%p200) target = $region28
    $region27: #{a_call__.1} parent=5 // pred_region
      // Predicated region
      $region29: #{a_call__.1} parent=27 // pred_check
        %p203 = pneg %p51
      $region30: #{a_call__.1} parent=27 // pred_check_branch
        %205 = sbr.rel (%p203) target = $region32
      $region31: #{a_call__.1} parent=27 // pred_region
        %p206 = scmp.lt.s32.totalorder %s17, 1
        %s207 = scalar_select %p206, %s17, 1
        %p208 = scmp.lt.s32.totalorder %s18, 0
        %s209 = scalar_select %p208, %s18, 0
        %s210 = smul.addr %s209, 54
        %s211 = smul.addr %s207, 54
        %s212 = sadd.s32 %s210, %s211
        %s213 = smul.addr %s212, 4
        %s214 = scalar_lea.vmem %s0, %s213
      $region32: #{a_call__.1} parent=27 // pred_fallthru
        _
    $region28: #{a_call__.1} parent=5 // pred_fallthru
      _
    %p215 = scmp.le.s32.totalorder 1, %s10
    %p216 = scmp.lt.s32.totalorder %s10, 3
    %p217 = pnand %p215, %p216
    %p218 = pneg %p217
    // Predicated region
    $region33: #{a_call__.1} parent=5 // pred_check
      _
    $region34: #{a_call__.1} parent=5 // pred_check_branch
      %220 = sbr.rel (%p217) target = $region36
    $region35: #{a_call__.1} parent=5 // pred_region
      %s221 = ssub.s32 %s10, 1
      %p222 = scmp.lt.s32.totalorder %s20, 1
      %s223 = scalar_select %p222, %s20, 1
      %p224 = scmp.lt.s32.totalorder %s21, 0
      %s225 = scalar_select %p224, %s21, 0
      %s226 = smul.addr %s225, 54
      %s227 = smul.addr %s223, 54
      %s228 = sadd.s32 %s226, %s227
      %s229 = smul.addr %s228, 4
      %s230 = scalar_lea.vmem %s0, %s229
      %p231 = pneg %p57
      %p232 = pneg %p54
      %p233 = scmp.lt.s32.totalorder %s22, 0
      %s234 = scalar_select %p233, %s22, 0
      %s235 = smul.addr %s234, 4
      %s236 = scalar_lea.vmem %s1, %s235
      %p237 = pneg %p83
      %p238 = pneg %p80
      %p239 = scmp.lt.s32.totalorder %s22, 0
      %s240 = scalar_select %p239, %s22, 0
      %s241 = scalar_lea.vmem %s2, %s240
      %p242 = pneg %p109
      %p243 = pneg %p106
      %p244 = scmp.lt.s32.totalorder %s22, 0
      %s245 = scalar_select %p244, %s22, 0
      %s246 = scalar_lea.vmem %s3, %s245
      %p247 = pneg %p135
      %p248 = pneg %p132
      %p249 = pneg %p165
      %p250 = pneg %p162
      %p251 = scmp.lt.s32.totalorder %s20, 1
      %s252 = scalar_select %p251, %s20, 1
      %p253 = scmp.lt.s32.totalorder %s21, 0
      %s254 = scalar_select %p253, %s21, 0
      %p255 = scmp.lt.s32.totalorder %s22, 0
      %s256 = scalar_select %p255, %s22, 0
      %s257 = smul.addr %s254, 32
      %s258 = sadd.s32 %s256, %s257
      %s259 = smul.addr %s252, 32
      %s260 = sadd.s32 %s258, %s259
      %s261 = smul.addr %s260, 8
      %s262 = scalar_lea.vmem %s4, %s261
      %p263 = scmp.lt.s32.totalorder %s20, 1
      %s264 = scalar_select %p263, %s20, 1
      %p265 = scmp.lt.s32.totalorder %s21, 0
      %s266 = scalar_select %p265, %s21, 0
      %s267 = smul.addr %s266, 54
      %s268 = smul.addr %s264, 54
      %s269 = sadd.s32 %s267, %s268
      %s270 = smul.addr %s269, 4
      %s271 = scalar_lea.vmem %s0, %s270
      %p272 = scmp.lt.s32.totalorder %s22, 0
      %s273 = scalar_select %p272, %s22, 0
      %s274 = smul.addr %s273, 4
      %s275 = scalar_lea.vmem %s1, %s274
      %p276 = scmp.lt.s32.totalorder %s22, 0
      %s277 = scalar_select %p276, %s22, 0
      %s278 = scalar_lea.vmem %s2, %s277
      %p279 = scmp.lt.s32.totalorder %s22, 0
      %s280 = scalar_select %p279, %s22, 0
      %s281 = scalar_lea.vmem %s3, %s280
      %p282 = scmp.lt.s32.totalorder %s20, 1
      %s283 = scalar_select %p282, %s20, 1
      %p284 = scmp.lt.s32.totalorder %s21, 0
      %s285 = scalar_select %p284, %s21, 0
      %p286 = scmp.lt.s32.totalorder %s22, 0
      %s287 = scalar_select %p286, %s22, 0
      %s288 = smul.addr %s285, 32
      %s289 = sadd.s32 %s287, %s288
      %s290 = smul.addr %s283, 32
      %s291 = sadd.s32 %s289, %s290
      %s292 = smul.addr %s291, 8
      %s293 = scalar_lea.vmem %s4, %s292
      %v295 = vld [vmem:[%s271] sm:$0xf]
      %v296 = vld [vmem:[%s271 + $0x4] sm:$0xf]
      %v297 = vld [vmem:[%s271 + $0x8] sm:$0x1]
      %v298 = vld [vmem:[%s271 + $0xc] sm:$0xf]
      %v299 = vld [vmem:[%s271 + $0x10] sm:$0xf]
      %v300 = vld [vmem:[%s271 + $0x14] sm:$0x1]
      %v301 = vld [vmem:[%s271 + $0x18] sm:$0xf]
      %v302 = vld [vmem:[%s271 + $0x1c] sm:$0xf]
      %v303 = vld [vmem:[%s271 + $0x20] sm:$0x1]
      %v304 = vld [vmem:[%s271 + $0x24] sm:$0xf]
      %v305 = vld [vmem:[%s271 + $0x28] sm:$0xf]
      %v306 = vld [vmem:[%s271 + $0x2c] sm:$0x1]
      %v307 = vld [vmem:[%s271 + $0x30] sm:$0xf]
      %v308 = vld [vmem:[%s271 + $0x34] sm:$0xf]
      %v309 = vld [vmem:[%s271 + $0x38] sm:$0x1]
      %v310 = vld [vmem:[%s271 + $0x3c] sm:$0xf]
      %v311 = vld [vmem:[%s271 + $0x40] sm:$0xf]
      %v312 = vld [vmem:[%s271 + $0x44] sm:$0x1]
      %v313 = vld [vmem:[%s271 + $0x48] sm:$0xf]
      %v314 = vld [vmem:[%s271 + $0x4c] sm:$0xf]
      %v315 = vld [vmem:[%s271 + $0x50] sm:$0x1]
      %v316 = vld [vmem:[%s271 + $0x54] sm:$0xf]
      %v317 = vld [vmem:[%s271 + $0x58] sm:$0xf]
      %v318 = vld [vmem:[%s271 + $0x5c] sm:$0x1]
      %v319 = vld [vmem:[%s271 + $0x60] sm:$0xf]
      %v320 = vld [vmem:[%s271 + $0x64] sm:$0xf]
      %v321 = vld [vmem:[%s271 + $0x68] sm:$0x1]
      %v322 = vld [vmem:[%s271 + $0x6c] sm:$0xf]
      %v323 = vld [vmem:[%s271 + $0x70] sm:$0xf]
      %v324 = vld [vmem:[%s271 + $0x74] sm:$0x1]
      %v325 = vld [vmem:[%s271 + $0x78] sm:$0xf]
      %v326 = vld [vmem:[%s271 + $0x7c] sm:$0xf]
      %v327 = vld [vmem:[%s271 + $0x80] sm:$0x1]
      %v328 = vld [vmem:[%s271 + $0x84] sm:$0xf]
      %v329 = vld [vmem:[%s271 + $0x88] sm:$0xf]
      %v330 = vld [vmem:[%s271 + $0x8c] sm:$0x1]
      %v331 = vld [vmem:[%s271 + $0x90] sm:$0xf]
      %v332 = vld [vmem:[%s271 + $0x94] sm:$0xf]
      %v333 = vld [vmem:[%s271 + $0x98] sm:$0x1]
      %v334 = vld [vmem:[%s271 + $0x9c] sm:$0xf]
      %v335 = vld [vmem:[%s271 + $0xa0] sm:$0xf]
      %v336 = vld [vmem:[%s271 + $0xa4] sm:$0x1]
      %v337 = vld [vmem:[%s271 + $0xa8] sm:$0xf]
      %v338 = vld [vmem:[%s271 + $0xac] sm:$0xf]
      %v339 = vld [vmem:[%s271 + $0xb0] sm:$0x1]
      %v340 = vld [vmem:[%s271 + $0xb4] sm:$0xf]
      %v341 = vld [vmem:[%s271 + $0xb8] sm:$0xf]
      %v342 = vld [vmem:[%s271 + $0xbc] sm:$0x1]
      %v343 = vld [vmem:[%s271 + $0xc0] sm:$0xf]
      %v344 = vld [vmem:[%s271 + $0xc4] sm:$0xf]
      %v345 = vld [vmem:[%s271 + $0xc8] sm:$0x1]
      %v346 = vld [vmem:[%s271 + $0xcc] sm:$0xf]
      %v347 = vld [vmem:[%s271 + $0xd0] sm:$0xf]
      %v348 = vld [vmem:[%s271 + $0xd4] sm:$0x1]
      %v381 = vunpack.c.l.b16 %v295
      %v382 = vunpack.c.l.b16 %v296
      %v383 = vunpack.c.l.b16 %v298
      %v384 = vunpack.c.l.b16 %v299
      %v385 = vunpack.c.l.b16 %v301
      %v386 = vunpack.c.l.b16 %v302
      %v387 = vunpack.c.l.b16 %v304
      %v388 = vunpack.c.l.b16 %v305
      %v389 = vunpack.c.l.b16 %v307
      %v390 = vunpack.c.l.b16 %v308
      %v391 = vunpack.c.l.b16 %v310
      %v392 = vunpack.c.l.b16 %v311
      %v393 = vunpack.c.l.b16 %v313
      %v394 = vunpack.c.l.b16 %v314
      %v395 = vunpack.c.l.b16 %v316
      %v396 = vunpack.c.l.b16 %v317
      %v397 = vunpack.c.l.b16 %v319
      %v398 = vunpack.c.l.b16 %v320
      %v399 = vunpack.c.l.b16 %v322
      %v400 = vunpack.c.l.b16 %v323
      %v401 = vunpack.c.l.b16 %v325
      %v402 = vunpack.c.l.b16 %v326
      %v403 = vunpack.c.l.b16 %v328
      %v404 = vunpack.c.l.b16 %v329
      %v405 = vunpack.c.l.b16 %v331
      %v406 = vunpack.c.l.b16 %v332
      %v407 = vunpack.c.l.b16 %v334
      %v408 = vunpack.c.l.b16 %v335
      %v409 = vunpack.c.l.b16 %v337
      %v410 = vunpack.c.l.b16 %v338
      %v411 = vunpack.c.l.b16 %v340
      %v412 = vunpack.c.l.b16 %v341
      %v413 = vpack.c.b16 %v382, %v381
      %v414 = vpack.c.b16 %v384, %v383
      %v415 = vpack.c.b16 %v386, %v385
      %v416 = vpack.c.b16 %v388, %v387
      %v417 = vpack.c.b16 %v390, %v389
      %v418 = vpack.c.b16 %v392, %v391
      %v419 = vpack.c.b16 %v394, %v393
      %v420 = vpack.c.b16 %v396, %v395
      %v421 = vpack.c.b16 %v398, %v397
      %v422 = vpack.c.b16 %v400, %v399
      %v423 = vpack.c.b16 %v402, %v401
      %v424 = vpack.c.b16 %v404, %v403
      %v425 = vpack.c.b16 %v406, %v405
      %v426 = vpack.c.b16 %v408, %v407
      %v427 = vpack.c.b16 %v410, %v409
      %v428 = vpack.c.b16 %v412, %v411
      %v445 = vunpack.c.l.b16 %v297
      %v446 = vunpack.c.l.b16 %v300
      %v447 = vunpack.c.l.b16 %v303
      %v448 = vunpack.c.l.b16 %v306
      %v449 = vunpack.c.l.b16 %v309
      %v450 = vunpack.c.l.b16 %v312
      %v451 = vunpack.c.l.b16 %v315
      %v452 = vunpack.c.l.b16 %v318
      %v453 = vunpack.c.l.b16 %v321
      %v454 = vunpack.c.l.b16 %v324
      %v455 = vunpack.c.l.b16 %v327
      %v456 = vunpack.c.l.b16 %v330
      %v457 = vunpack.c.l.b16 %v333
      %v458 = vunpack.c.l.b16 %v336
      %v459 = vunpack.c.l.b16 %v339
      %v460 = vunpack.c.l.b16 %v342
      %v461 = vpack.c.b16 %v445, %v445
      %v462 = vpack.c.b16 %v446, %v446
      %v463 = vpack.c.b16 %v447, %v447
      %v464 = vpack.c.b16 %v448, %v448
      %v465 = vpack.c.b16 %v449, %v449
      %v466 = vpack.c.b16 %v450, %v450
      %v467 = vpack.c.b16 %v451, %v451
      %v468 = vpack.c.b16 %v452, %v452
      %v469 = vpack.c.b16 %v453, %v453
      %v470 = vpack.c.b16 %v454, %v454
      %v471 = vpack.c.b16 %v455, %v455
      %v472 = vpack.c.b16 %v456, %v456
      %v473 = vpack.c.b16 %v457, %v457
      %v474 = vpack.c.b16 %v458, %v458
      %v475 = vpack.c.b16 %v459, %v459
      %v476 = vpack.c.b16 %v460, %v460
      %vm477 = vsmask.f32 7424
      %v479 = vshrl.u32 %v413, 16
      %v481 = vshll.u32 %v413, 16
      %v483 = vrot.slane %v481, 1
      %v484 = vor.u32 %v479, %v483
      %v486 = vshll.u32 %v461, 16
      %v488 = vrot.slane %v486, 1
      %v489 = vsel %vm477, %v484, %v488
      %v491 = vshrl.u32 %v414, 16
      %v493 = vshll.u32 %v414, 16
      %v495 = vrot.slane %v493, 1
      %v496 = vor.u32 %v491, %v495
      %v498 = vshll.u32 %v462, 16
      %v500 = vrot.slane %v498, 1
      %v501 = vsel %vm477, %v496, %v500
      %v503 = vshrl.u32 %v415, 16
      %v505 = vshll.u32 %v415, 16
      %v507 = vrot.slane %v505, 1
      %v508 = vor.u32 %v503, %v507
      %v510 = vshll.u32 %v463, 16
      %v512 = vrot.slane %v510, 1
      %v513 = vsel %vm477, %v508, %v512
      %v515 = vshrl.u32 %v416, 16
      %v517 = vshll.u32 %v416, 16
      %v519 = vrot.slane %v517, 1
      %v520 = vor.u32 %v515, %v519
      %v522 = vshll.u32 %v464, 16
      %v524 = vrot.slane %v522, 1
      %v525 = vsel %vm477, %v520, %v524
      %v527 = vshrl.u32 %v417, 16
      %v529 = vshll.u32 %v417, 16
      %v531 = vrot.slane %v529, 1
      %v532 = vor.u32 %v527, %v531
      %v534 = vshll.u32 %v465, 16
      %v536 = vrot.slane %v534, 1
      %v537 = vsel %vm477, %v532, %v536
      %v539 = vshrl.u32 %v418, 16
      %v541 = vshll.u32 %v418, 16
      %v543 = vrot.slane %v541, 1
      %v544 = vor.u32 %v539, %v543
      %v546 = vshll.u32 %v466, 16
      %v548 = vrot.slane %v546, 1
      %v549 = vsel %vm477, %v544, %v548
      %v551 = vshrl.u32 %v419, 16
      %v553 = vshll.u32 %v419, 16
      %v555 = vrot.slane %v553, 1
      %v556 = vor.u32 %v551, %v555
      %v558 = vshll.u32 %v467, 16
      %v560 = vrot.slane %v558, 1
      %v561 = vsel %vm477, %v556, %v560
      %v563 = vshrl.u32 %v420, 16
      %v565 = vshll.u32 %v420, 16
      %v567 = vrot.slane %v565, 1
      %v568 = vor.u32 %v563, %v567
      %v570 = vshll.u32 %v468, 16
      %v572 = vrot.slane %v570, 1
      %v573 = vsel %vm477, %v568, %v572
      %v575 = vshrl.u32 %v421, 16
      %v577 = vshll.u32 %v421, 16
      %v579 = vrot.slane %v577, 1
      %v580 = vor.u32 %v575, %v579
      %v582 = vshll.u32 %v469, 16
      %v584 = vrot.slane %v582, 1
      %v585 = vsel %vm477, %v580, %v584
      %v587 = vshrl.u32 %v422, 16
      %v589 = vshll.u32 %v422, 16
      %v591 = vrot.slane %v589, 1
      %v592 = vor.u32 %v587, %v591
      %v594 = vshll.u32 %v470, 16
      %v596 = vrot.slane %v594, 1
      %v597 = vsel %vm477, %v592, %v596
      %v599 = vshrl.u32 %v423, 16
      %v601 = vshll.u32 %v423, 16
      %v603 = vrot.slane %v601, 1
      %v604 = vor.u32 %v599, %v603
      %v606 = vshll.u32 %v471, 16
      %v608 = vrot.slane %v606, 1
      %v609 = vsel %vm477, %v604, %v608
      %v611 = vshrl.u32 %v424, 16
      %v613 = vshll.u32 %v424, 16
      %v615 = vrot.slane %v613, 1
      %v616 = vor.u32 %v611, %v615
      %v618 = vshll.u32 %v472, 16
      %v620 = vrot.slane %v618, 1
      %v621 = vsel %vm477, %v616, %v620
      %v623 = vshrl.u32 %v425, 16
      %v625 = vshll.u32 %v425, 16
      %v627 = vrot.slane %v625, 1
      %v628 = vor.u32 %v623, %v627
      %v630 = vshll.u32 %v473, 16
      %v632 = vrot.slane %v630, 1
      %v633 = vsel %vm477, %v628, %v632
      %v635 = vshrl.u32 %v426, 16
      %v637 = vshll.u32 %v426, 16
      %v639 = vrot.slane %v637, 1
      %v640 = vor.u32 %v635, %v639
      %v642 = vshll.u32 %v474, 16
      %v644 = vrot.slane %v642, 1
      %v645 = vsel %vm477, %v640, %v644
      %v647 = vshrl.u32 %v427, 16
      %v649 = vshll.u32 %v427, 16
      %v651 = vrot.slane %v649, 1
      %v652 = vor.u32 %v647, %v651
      %v654 = vshll.u32 %v475, 16
      %v656 = vrot.slane %v654, 1
      %v657 = vsel %vm477, %v652, %v656
      %v659 = vshrl.u32 %v428, 16
      %v661 = vshll.u32 %v428, 16
      %v663 = vrot.slane %v661, 1
      %v664 = vor.u32 %v659, %v663
      %v666 = vshll.u32 %v476, 16
      %v668 = vrot.slane %v666, 1
      %v669 = vsel %vm477, %v664, %v668
      %670 = vrot.lane.b32.xlu0 %v489, 8
      %v671 = vpop.permute.xlu0 %670
      %672 = vrot.lane.b32.xlu0 %v501, 8
      %v673 = vpop.permute.xlu0 %672
      %674 = vrot.lane.b32.xlu0 %v513, 8
      %v675 = vpop.permute.xlu0 %674
      %676 = vrot.lane.b32.xlu0 %v525, 8
      %v677 = vpop.permute.xlu0 %676
      %678 = vrot.lane.b32.xlu0 %v537, 8
      %v679 = vpop.permute.xlu0 %678
      %680 = vrot.lane.b32.xlu0 %v549, 8
      %v681 = vpop.permute.xlu0 %680
      %682 = vrot.lane.b32.xlu0 %v561, 8
      %v683 = vpop.permute.xlu0 %682
      %684 = vrot.lane.b32.xlu0 %v573, 8
      %v685 = vpop.permute.xlu0 %684
      %686 = vrot.lane.b32.xlu0 %v585, 8
      %v687 = vpop.permute.xlu0 %686
      %688 = vrot.lane.b32.xlu0 %v597, 8
      %v689 = vpop.permute.xlu0 %688
      %690 = vrot.lane.b32.xlu0 %v609, 8
      %v691 = vpop.permute.xlu0 %690
      %692 = vrot.lane.b32.xlu0 %v621, 8
      %v693 = vpop.permute.xlu0 %692
      %694 = vrot.lane.b32.xlu0 %v633, 8
      %v695 = vpop.permute.xlu0 %694
      %696 = vrot.lane.b32.xlu0 %v645, 8
      %v697 = vpop.permute.xlu0 %696
      %698 = vrot.lane.b32.xlu0 %v657, 8
      %v699 = vpop.permute.xlu0 %698
      %700 = vrot.lane.b32.xlu0 %v669, 8
      %v701 = vpop.permute.xlu0 %700
      %vm702 = vcmask 1046528
      %v703 = vrot.slane %v413, 1
      %v704 = vrot.slane %v461, 1
      %v705 = vsel %vm702, %v703, %v704
      %v706 = vrot.slane %v414, 1
      %v707 = vrot.slane %v462, 1
      %v708 = vsel %vm702, %v706, %v707
      %v709 = vrot.slane %v415, 1
      %v710 = vrot.slane %v463, 1
      %v711 = vsel %vm702, %v709, %v710
      %v712 = vrot.slane %v416, 1
      %v713 = vrot.slane %v464, 1
      %v714 = vsel %vm702, %v712, %v713
      %v715 = vrot.slane %v417, 1
      %v716 = vrot.slane %v465, 1
      %v717 = vsel %vm702, %v715, %v716
      %v718 = vrot.slane %v418, 1
      %v719 = vrot.slane %v466, 1
      %v720 = vsel %vm702, %v718, %v719
      %v721 = vrot.slane %v419, 1
      %v722 = vrot.slane %v467, 1
      %v723 = vsel %vm702, %v721, %v722
      %v724 = vrot.slane %v420, 1
      %v725 = vrot.slane %v468, 1
      %v726 = vsel %vm702, %v724, %v725
      %v727 = vrot.slane %v421, 1
      %v728 = vrot.slane %v469, 1
      %v729 = vsel %vm702, %v727, %v728
      %v730 = vrot.slane %v422, 1
      %v731 = vrot.slane %v470, 1
      %v732 = vsel %vm702, %v730, %v731
      %v733 = vrot.slane %v423, 1
      %v734 = vrot.slane %v471, 1
      %v735 = vsel %vm702, %v733, %v734
      %v736 = vrot.slane %v424, 1
      %v737 = vrot.slane %v472, 1
      %v738 = vsel %vm702, %v736, %v737
      %v739 = vrot.slane %v425, 1
      %v740 = vrot.slane %v473, 1
      %v741 = vsel %vm702, %v739, %v740
      %v742 = vrot.slane %v426, 1
      %v743 = vrot.slane %v474, 1
      %v744 = vsel %vm702, %v742, %v743
      %v745 = vrot.slane %v427, 1
      %v746 = vrot.slane %v475, 1
      %v747 = vsel %vm702, %v745, %v746
      %v748 = vrot.slane %v428, 1
      %v749 = vrot.slane %v476, 1
      %v750 = vsel %vm702, %v748, %v749
      %751 = vrot.lane.b32.xlu0 %v705, 16
      %v752 = vpop.permute.xlu0 %751
      %753 = vrot.lane.b32.xlu0 %v708, 16
      %v754 = vpop.permute.xlu0 %753
      %755 = vrot.lane.b32.xlu0 %v711, 16
      %v756 = vpop.permute.xlu0 %755
      %757 = vrot.lane.b32.xlu0 %v714, 16
      %v758 = vpop.permute.xlu0 %757
      %759 = vrot.lane.b32.xlu0 %v717, 16
      %v760 = vpop.permute.xlu0 %759
      %761 = vrot.lane.b32.xlu0 %v720, 16
      %v762 = vpop.permute.xlu0 %761
      %763 = vrot.lane.b32.xlu0 %v723, 16
      %v764 = vpop.permute.xlu0 %763
      %765 = vrot.lane.b32.xlu0 %v726, 16
      %v766 = vpop.permute.xlu0 %765
      %767 = vrot.lane.b32.xlu0 %v729, 16
      %v768 = vpop.permute.xlu0 %767
      %769 = vrot.lane.b32.xlu0 %v732, 16
      %v770 = vpop.permute.xlu0 %769
      %771 = vrot.lane.b32.xlu0 %v735, 16
      %v772 = vpop.permute.xlu0 %771
      %773 = vrot.lane.b32.xlu0 %v738, 16
      %v774 = vpop.permute.xlu0 %773
      %775 = vrot.lane.b32.xlu0 %v741, 16
      %v776 = vpop.permute.xlu0 %775
      %777 = vrot.lane.b32.xlu0 %v744, 16
      %v778 = vpop.permute.xlu0 %777
      %779 = vrot.lane.b32.xlu0 %v747, 16
      %v780 = vpop.permute.xlu0 %779
      %781 = vrot.lane.b32.xlu0 %v750, 16
      %v782 = vpop.permute.xlu0 %781
      %v785 = vunpack.c.l.b16 %v343
      %v786 = vunpack.c.l.b16 %v344
      %v787 = vpack.c.b16 %v786, %v785
      %788 = vrot.lane.b32.xlu0 %v414, 24
      %v789 = vpop.permute.xlu0 %788
      %790 = vrot.lane.b32.xlu0 %v415, 24
      %v791 = vpop.permute.xlu0 %790
      %792 = vrot.lane.b32.xlu0 %v416, 24
      %v793 = vpop.permute.xlu0 %792
      %794 = vrot.lane.b32.xlu0 %v417, 24
      %v795 = vpop.permute.xlu0 %794
      %796 = vrot.lane.b32.xlu0 %v418, 24
      %v797 = vpop.permute.xlu0 %796
      %798 = vrot.lane.b32.xlu0 %v419, 24
      %v799 = vpop.permute.xlu0 %798
      %800 = vrot.lane.b32.xlu0 %v420, 24
      %v801 = vpop.permute.xlu0 %800
      %802 = vrot.lane.b32.xlu0 %v421, 24
      %v803 = vpop.permute.xlu0 %802
      %804 = vrot.lane.b32.xlu0 %v422, 24
      %v805 = vpop.permute.xlu0 %804
      %806 = vrot.lane.b32.xlu0 %v423, 24
      %v807 = vpop.permute.xlu0 %806
      %808 = vrot.lane.b32.xlu0 %v424, 24
      %v809 = vpop.permute.xlu0 %808
      %810 = vrot.lane.b32.xlu0 %v425, 24
      %v811 = vpop.permute.xlu0 %810
      %812 = vrot.lane.b32.xlu0 %v426, 24
      %v813 = vpop.permute.xlu0 %812
      %814 = vrot.lane.b32.xlu0 %v427, 24
      %v815 = vpop.permute.xlu0 %814
      %816 = vrot.lane.b32.xlu0 %v428, 24
      %v817 = vpop.permute.xlu0 %816
      %818 = vrot.lane.b32.xlu0 %v787, 24
      %v819 = vpop.permute.xlu0 %818
      %v821 = vunpack.c.l.b16 %v345
      %v822 = vpack.c.b16 %v821, %v821
      %v824 = vshrl.u32 %v787, 16
      %v826 = vshll.u32 %v787, 16
      %v828 = vrot.slane %v826, 1
      %v829 = vor.u32 %v824, %v828
      %v831 = vshll.u32 %v822, 16
      %v833 = vrot.slane %v831, 1
      %v834 = vsel %vm477, %v829, %v833
      %835 = vrot.lane.b32.xlu0 %v501, 32
      %v836 = vpop.permute.xlu0 %835
      %837 = vrot.lane.b32.xlu0 %v513, 32
      %v838 = vpop.permute.xlu0 %837
      %839 = vrot.lane.b32.xlu0 %v525, 32
      %v840 = vpop.permute.xlu0 %839
      %841 = vrot.lane.b32.xlu0 %v537, 32
      %v842 = vpop.permute.xlu0 %841
      %843 = vrot.lane.b32.xlu0 %v549, 32
      %v844 = vpop.permute.xlu0 %843
      %845 = vrot.lane.b32.xlu0 %v561, 32
      %v846 = vpop.permute.xlu0 %845
      %847 = vrot.lane.b32.xlu0 %v573, 32
      %v848 = vpop.permute.xlu0 %847
      %849 = vrot.lane.b32.xlu0 %v585, 32
      %v850 = vpop.permute.xlu0 %849
      %851 = vrot.lane.b32.xlu0 %v597, 32
      %v852 = vpop.permute.xlu0 %851
      %853 = vrot.lane.b32.xlu0 %v609, 32
      %v854 = vpop.permute.xlu0 %853
      %855 = vrot.lane.b32.xlu0 %v621, 32
      %v856 = vpop.permute.xlu0 %855
      %857 = vrot.lane.b32.xlu0 %v633, 32
      %v858 = vpop.permute.xlu0 %857
      %859 = vrot.lane.b32.xlu0 %v645, 32
      %v860 = vpop.permute.xlu0 %859
      %861 = vrot.lane.b32.xlu0 %v657, 32
      %v862 = vpop.permute.xlu0 %861
      %863 = vrot.lane.b32.xlu0 %v669, 32
      %v864 = vpop.permute.xlu0 %863
      %865 = vrot.lane.b32.xlu0 %v834, 32
      %v866 = vpop.permute.xlu0 %865
      %v867 = vrot.slane %v787, 1
      %v868 = vrot.slane %v822, 1
      %v869 = vsel %vm702, %v867, %v868
      %870 = vrot.lane.b32.xlu0 %v708, 40
      %v871 = vpop.permute.xlu0 %870
      %872 = vrot.lane.b32.xlu0 %v711, 40
      %v873 = vpop.permute.xlu0 %872
      %874 = vrot.lane.b32.xlu0 %v714, 40
      %v875 = vpop.permute.xlu0 %874
      %876 = vrot.lane.b32.xlu0 %v717, 40
      %v877 = vpop.permute.xlu0 %876
      %878 = vrot.lane.b32.xlu0 %v720, 40
      %v879 = vpop.permute.xlu0 %878
      %880 = vrot.lane.b32.xlu0 %v723, 40
      %v881 = vpop.permute.xlu0 %880
      %882 = vrot.lane.b32.xlu0 %v726, 40
      %v883 = vpop.permute.xlu0 %882
      %884 = vrot.lane.b32.xlu0 %v729, 40
      %v885 = vpop.permute.xlu0 %884
      %886 = vrot.lane.b32.xlu0 %v732, 40
      %v887 = vpop.permute.xlu0 %886
      %888 = vrot.lane.b32.xlu0 %v735, 40
      %v889 = vpop.permute.xlu0 %888
      %890 = vrot.lane.b32.xlu0 %v738, 40
      %v891 = vpop.permute.xlu0 %890
      %892 = vrot.lane.b32.xlu0 %v741, 40
      %v893 = vpop.permute.xlu0 %892
      %894 = vrot.lane.b32.xlu0 %v744, 40
      %v895 = vpop.permute.xlu0 %894
      %896 = vrot.lane.b32.xlu0 %v747, 40
      %v897 = vpop.permute.xlu0 %896
      %898 = vrot.lane.b32.xlu0 %v750, 40
      %v899 = vpop.permute.xlu0 %898
      %900 = vrot.lane.b32.xlu0 %v869, 40
      %v901 = vpop.permute.xlu0 %900
      %v904 = vunpack.c.l.b16 %v346
      %v905 = vunpack.c.l.b16 %v347
      %v906 = vpack.c.b16 %v905, %v904
      %907 = vrot.lane.b32.xlu0 %v415, 48
      %v908 = vpop.permute.xlu0 %907
      %909 = vrot.lane.b32.xlu0 %v416, 48
      %v910 = vpop.permute.xlu0 %909
      %911 = vrot.lane.b32.xlu0 %v417, 48
      %v912 = vpop.permute.xlu0 %911
      %913 = vrot.lane.b32.xlu0 %v418, 48
      %v914 = vpop.permute.xlu0 %913
      %915 = vrot.lane.b32.xlu0 %v419, 48
      %v916 = vpop.permute.xlu0 %915
      %917 = vrot.lane.b32.xlu0 %v420, 48
      %v918 = vpop.permute.xlu0 %917
      %919 = vrot.lane.b32.xlu0 %v421, 48
      %v920 = vpop.permute.xlu0 %919
      %921 = vrot.lane.b32.xlu0 %v422, 48
      %v922 = vpop.permute.xlu0 %921
      %923 = vrot.lane.b32.xlu0 %v423, 48
      %v924 = vpop.permute.xlu0 %923
      %925 = vrot.lane.b32.xlu0 %v424, 48
      %v926 = vpop.permute.xlu0 %925
      %927 = vrot.lane.b32.xlu0 %v425, 48
      %v928 = vpop.permute.xlu0 %927
      %929 = vrot.lane.b32.xlu0 %v426, 48
      %v930 = vpop.permute.xlu0 %929
      %931 = vrot.lane.b32.xlu0 %v427, 48
      %v932 = vpop.permute.xlu0 %931
      %933 = vrot.lane.b32.xlu0 %v428, 48
      %v934 = vpop.permute.xlu0 %933
      %935 = vrot.lane.b32.xlu0 %v787, 48
      %v936 = vpop.permute.xlu0 %935
      %937 = vrot.lane.b32.xlu0 %v906, 48
      %v938 = vpop.permute.xlu0 %937
      %v940 = vunpack.c.l.b16 %v348
      %v941 = vpack.c.b16 %v940, %v940
      %v943 = vshrl.u32 %v906, 16
      %v945 = vshll.u32 %v906, 16
      %v947 = vrot.slane %v945, 1
      %v948 = vor.u32 %v943, %v947
      %v950 = vshll.u32 %v941, 16
      %v952 = vrot.slane %v950, 1
      %v953 = vsel %vm477, %v948, %v952
      %954 = vrot.lane.b32.xlu0 %v513, 56
      %v955 = vpop.permute.xlu0 %954
      %956 = vrot.lane.b32.xlu0 %v525, 56
      %v957 = vpop.permute.xlu0 %956
      %958 = vrot.lane.b32.xlu0 %v537, 56
      %v959 = vpop.permute.xlu0 %958
      %960 = vrot.lane.b32.xlu0 %v549, 56
      %v961 = vpop.permute.xlu0 %960
      %962 = vrot.lane.b32.xlu0 %v561, 56
      %v963 = vpop.permute.xlu0 %962
      %964 = vrot.lane.b32.xlu0 %v573, 56
      %v965 = vpop.permute.xlu0 %964
      %966 = vrot.lane.b32.xlu0 %v585, 56
      %v967 = vpop.permute.xlu0 %966
      %968 = vrot.lane.b32.xlu0 %v597, 56
      %v969 = vpop.permute.xlu0 %968
      %970 = vrot.lane.b32.xlu0 %v609, 56
      %v971 = vpop.permute.xlu0 %970
      %972 = vrot.lane.b32.xlu0 %v621, 56
      %v973 = vpop.permute.xlu0 %972
      %974 = vrot.lane.b32.xlu0 %v633, 56
      %v975 = vpop.permute.xlu0 %974
      %976 = vrot.lane.b32.xlu0 %v645, 56
      %v977 = vpop.permute.xlu0 %976
      %978 = vrot.lane.b32.xlu0 %v657, 56
      %v979 = vpop.permute.xlu0 %978
      %980 = vrot.lane.b32.xlu0 %v669, 56
      %v981 = vpop.permute.xlu0 %980
      %982 = vrot.lane.b32.xlu0 %v834, 56
      %v983 = vpop.permute.xlu0 %982
      %984 = vrot.lane.b32.xlu0 %v953, 56
      %v985 = vpop.permute.xlu0 %984
      %v986 = vrot.slane %v906, 1
      %v987 = vrot.slane %v941, 1
      %v988 = vsel %vm702, %v986, %v987
      %989 = vrot.lane.b32.xlu0 %v711, 64
      %v990 = vpop.permute.xlu0 %989
      %991 = vrot.lane.b32.xlu0 %v714, 64
      %v992 = vpop.permute.xlu0 %991
      %993 = vrot.lane.b32.xlu0 %v717, 64
      %v994 = vpop.permute.xlu0 %993
      %995 = vrot.lane.b32.xlu0 %v720, 64
      %v996 = vpop.permute.xlu0 %995
      %997 = vrot.lane.b32.xlu0 %v723, 64
      %v998 = vpop.permute.xlu0 %997
      %999 = vrot.lane.b32.xlu0 %v726, 64
      %v1000 = vpop.permute.xlu0 %999
      %1001 = vrot.lane.b32.xlu0 %v729, 64
      %v1002 = vpop.permute.xlu0 %1001
      %1003 = vrot.lane.b32.xlu0 %v732, 64
      %v1004 = vpop.permute.xlu0 %1003
      %1005 = vrot.lane.b32.xlu0 %v735, 64
      %v1006 = vpop.permute.xlu0 %1005
      %1007 = vrot.lane.b32.xlu0 %v738, 64
      %v1008 = vpop.permute.xlu0 %1007
      %1009 = vrot.lane.b32.xlu0 %v741, 64
      %v1010 = vpop.permute.xlu0 %1009
      %1011 = vrot.lane.b32.xlu0 %v744, 64
      %v1012 = vpop.permute.xlu0 %1011
      %1013 = vrot.lane.b32.xlu0 %v747, 64
      %v1014 = vpop.permute.xlu0 %1013
      %1015 = vrot.lane.b32.xlu0 %v750, 64
      %v1016 = vpop.permute.xlu0 %1015
      %1017 = vrot.lane.b32.xlu0 %v869, 64
      %v1018 = vpop.permute.xlu0 %1017
      %1019 = vrot.lane.b32.xlu0 %v988, 64
      %v1020 = vpop.permute.xlu0 %1019
      %vm1021 = vcmask 64512
      %v1023 = vsel %vm1021, %v413, %v671
      %v1025 = vsel %vm1021, %v414, %v673
      %v1027 = vsel %vm1021, %v415, %v675
      %v1029 = vsel %vm1021, %v416, %v677
      %v1031 = vsel %vm1021, %v417, %v679
      %v1033 = vsel %vm1021, %v418, %v681
      %v1035 = vsel %vm1021, %v419, %v683
      %v1037 = vsel %vm1021, %v420, %v685
      %v1039 = vsel %vm1021, %v421, %v687
      %v1041 = vsel %vm1021, %v422, %v689
      %v1043 = vsel %vm1021, %v423, %v691
      %v1045 = vsel %vm1021, %v424, %v693
      %v1047 = vsel %vm1021, %v425, %v695
      %v1049 = vsel %vm1021, %v426, %v697
      %v1051 = vsel %vm1021, %v427, %v699
      %v1053 = vsel %vm1021, %v428, %v701
      %vm1054 = vcmask 130048
      %v1056 = vsel %vm1054, %v1023, %v752
      %v1058 = vsel %vm1054, %v1025, %v754
      %v1060 = vsel %vm1054, %v1027, %v756
      %v1062 = vsel %vm1054, %v1029, %v758
      %v1064 = vsel %vm1054, %v1031, %v760
      %v1066 = vsel %vm1054, %v1033, %v762
      %v1068 = vsel %vm1054, %v1035, %v764
      %v1070 = vsel %vm1054, %v1037, %v766
      %v1072 = vsel %vm1054, %v1039, %v768
      %v1074 = vsel %vm1054, %v1041, %v770
      %v1076 = vsel %vm1054, %v1043, %v772
      %v1078 = vsel %vm1054, %v1045, %v774
      %v1080 = vsel %vm1054, %v1047, %v776
      %v1082 = vsel %vm1054, %v1049, %v778
      %v1084 = vsel %vm1054, %v1051, %v780
      %v1086 = vsel %vm1054, %v1053, %v782
      %vm1087 = vcmask 195584
      %v1089 = vsel %vm1087, %v1056, %v789
      %v1091 = vsel %vm1087, %v1058, %v791
      %v1093 = vsel %vm1087, %v1060, %v793
      %v1095 = vsel %vm1087, %v1062, %v795
      %v1097 = vsel %vm1087, %v1064, %v797
      %v1099 = vsel %vm1087, %v1066, %v799
      %v1101 = vsel %vm1087, %v1068, %v801
      %v1103 = vsel %vm1087, %v1070, %v803
      %v1105 = vsel %vm1087, %v1072, %v805
      %v1107 = vsel %vm1087, %v1074, %v807
      %v1109 = vsel %vm1087, %v1076, %v809
      %v1111 = vsel %vm1087, %v1078, %v811
      %v1113 = vsel %vm1087, %v1080, %v813
      %v1115 = vsel %vm1087, %v1082, %v815
      %v1117 = vsel %vm1087, %v1084, %v817
      %v1119 = vsel %vm1087, %v1086, %v819
      %vm1120 = vcmask 261120
      %v1122 = vsel %vm1120, %v1089, %v836
      %v1124 = vsel %vm1120, %v1091, %v838
      %v1126 = vsel %vm1120, %v1093, %v840
      %v1128 = vsel %vm1120, %v1095, %v842
      %v1130 = vsel %vm1120, %v1097, %v844
      %v1132 = vsel %vm1120, %v1099, %v846
      %v1134 = vsel %vm1120, %v1101, %v848
      %v1136 = vsel %vm1120, %v1103, %v850
      %v1138 = vsel %vm1120, %v1105, %v852
      %v1140 = vsel %vm1120, %v1107, %v854
      %v1142 = vsel %vm1120, %v1109, %v856
      %v1144 = vsel %vm1120, %v1111, %v858
      %v1146 = vsel %vm1120, %v1113, %v860
      %v1148 = vsel %vm1120, %v1115, %v862
      %v1150 = vsel %vm1120, %v1117, %v864
      %v1152 = vsel %vm1120, %v1119, %v866
      %vm1153 = vcmask 326656
      %v1155 = vsel %vm1153, %v1122, %v871
      %v1157 = vsel %vm1153, %v1124, %v873
      %v1159 = vsel %vm1153, %v1126, %v875
      %v1161 = vsel %vm1153, %v1128, %v877
      %v1163 = vsel %vm1153, %v1130, %v879
      %v1165 = vsel %vm1153, %v1132, %v881
      %v1167 = vsel %vm1153, %v1134, %v883
      %v1169 = vsel %vm1153, %v1136, %v885
      %v1171 = vsel %vm1153, %v1138, %v887
      %v1173 = vsel %vm1153, %v1140, %v889
      %v1175 = vsel %vm1153, %v1142, %v891
      %v1177 = vsel %vm1153, %v1144, %v893
      %v1179 = vsel %vm1153, %v1146, %v895
      %v1181 = vsel %vm1153, %v1148, %v897
      %v1183 = vsel %vm1153, %v1150, %v899
      %v1185 = vsel %vm1153, %v1152, %v901
      %vm1186 = vcmask 392192
      %v1188 = vsel %vm1186, %v1155, %v908
      %v1190 = vsel %vm1186, %v1157, %v910
      %v1192 = vsel %vm1186, %v1159, %v912
      %v1194 = vsel %vm1186, %v1161, %v914
      %v1196 = vsel %vm1186, %v1163, %v916
      %v1198 = vsel %vm1186, %v1165, %v918
      %v1200 = vsel %vm1186, %v1167, %v920
      %v1202 = vsel %vm1186, %v1169, %v922
      %v1204 = vsel %vm1186, %v1171, %v924
      %v1206 = vsel %vm1186, %v1173, %v926
      %v1208 = vsel %vm1186, %v1175, %v928
      %v1210 = vsel %vm1186, %v1177, %v930
      %v1212 = vsel %vm1186, %v1179, %v932
      %v1214 = vsel %vm1186, %v1181, %v934
      %v1216 = vsel %vm1186, %v1183, %v936
      %v1218 = vsel %vm1186, %v1185, %v938
      %vm1219 = vcmask 457728
      %v1221 = vsel %vm1219, %v1188, %v955
      %v1223 = vsel %vm1219, %v1190, %v957
      %v1225 = vsel %vm1219, %v1192, %v959
      %v1227 = vsel %vm1219, %v1194, %v961
      %v1229 = vsel %vm1219, %v1196, %v963
      %v1231 = vsel %vm1219, %v1198, %v965
      %v1233 = vsel %vm1219, %v1200, %v967
      %v1235 = vsel %vm1219, %v1202, %v969
      %v1237 = vsel %vm1219, %v1204, %v971
      %v1239 = vsel %vm1219, %v1206, %v973
      %v1241 = vsel %vm1219, %v1208, %v975
      %v1243 = vsel %vm1219, %v1210, %v977
      %v1245 = vsel %vm1219, %v1212, %v979
      %v1247 = vsel %vm1219, %v1214, %v981
      %v1249 = vsel %vm1219, %v1216, %v983
      %v1251 = vsel %vm1219, %v1218, %v985
      %vm1252 = vcmask 523264
      %v1254 = vsel %vm1252, %v1221, %v990
      %v1256 = vsel %vm1252, %v1223, %v992
      %v1258 = vsel %vm1252, %v1225, %v994
      %v1260 = vsel %vm1252, %v1227, %v996
      %v1262 = vsel %vm1252, %v1229, %v998
      %v1264 = vsel %vm1252, %v1231, %v1000
      %v1266 = vsel %vm1252, %v1233, %v1002
      %v1268 = vsel %vm1252, %v1235, %v1004
      %v1270 = vsel %vm1252, %v1237, %v1006
      %v1272 = vsel %vm1252, %v1239, %v1008
      %v1274 = vsel %vm1252, %v1241, %v1010
      %v1276 = vsel %vm1252, %v1243, %v1012
      %v1278 = vsel %vm1252, %v1245, %v1014
      %v1280 = vsel %vm1252, %v1247, %v1016
      %v1282 = vsel %vm1252, %v1249, %v1018
      %v1284 = vsel %vm1252, %v1251, %v1020
      %v1285 = vld [vmem:[%s275] sm:$0xf]
      %v1286 = vld [vmem:[%s275 + $0x4] sm:$0xf]
      %v1287 = vld [vmem:[%s275 + $0x8] sm:$0xf]
      %v1288 = vld [vmem:[%s275 + $0xc] sm:$0xf]
      %v1289 = vld [vmem:[%s275 + $0x10] sm:$0xf]
      %v1290 = vld [vmem:[%s275 + $0x14] sm:$0xf]
      %v1291 = vld [vmem:[%s275 + $0x18] sm:$0xf]
      %v1292 = vld [vmem:[%s275 + $0x1c] sm:$0xf]
      %v1293 = vld [vmem:[%s275 + $0x20] sm:$0xf]
      %v1303 = vunpack.c.l.b16 %v1285
      %v1304 = vunpack.c.l.b16 %v1286
      %v1305 = vunpack.c.l.b16 %v1287
      %v1306 = vunpack.c.l.b16 %v1288
      %v1307 = vunpack.c.l.b16 %v1289
      %v1308 = vunpack.c.l.b16 %v1290
      %v1309 = vunpack.c.l.b16 %v1291
      %v1310 = vunpack.c.l.b16 %v1292
      %v1311 = vunpack.c.l.b16 %v1293
      %v1312 = vpack.c.b16 %v1304, %v1303
      %v1313 = vpack.c.b16 %v1306, %v1305
      %v1314 = vpack.c.b16 %v1308, %v1307
      %v1315 = vpack.c.b16 %v1310, %v1309
      %v1316 = vpack.c.b16 %v1311, %v1311
      %vm1321 = vcmask 588800
      %v1322 = vsel %vm1321, %v1254, 0
      %v1324 = vsel %vm1321, %v1256, 0
      %v1326 = vsel %vm1321, %v1258, 0
      %v1328 = vsel %vm1321, %v1260, 0
      %v1330 = vsel %vm1321, %v1262, 0
      %v1332 = vsel %vm1321, %v1264, 0
      %v1334 = vsel %vm1321, %v1266, 0
      %v1336 = vsel %vm1321, %v1268, 0
      %v1338 = vsel %vm1321, %v1270, 0
      %v1340 = vsel %vm1321, %v1272, 0
      %v1342 = vsel %vm1321, %v1274, 0
      %v1344 = vsel %vm1321, %v1276, 0
      %v1346 = vsel %vm1321, %v1278, 0
      %v1348 = vsel %vm1321, %v1280, 0
      %v1350 = vsel %vm1321, %v1282, 0
      %v1352 = vsel %vm1321, %v1284, 0
      %vm1354 = vcmask 1043456
      %v1356 = vsel %vm1354, %v1316, 0
      %1358 = vmatpush.bf16.msra.mxu0 0
      %1359 = vmatpush.bf16.msra.mxu0 0
      %1360 = vmatpush.bf16.msra.mxu0 0
      %1361 = vmatpush.bf16.msra.mxu0 %v1356
      %1362 = vmatpush.bf16.msra.mxu0 %v1315
      %1363 = vmatpush.bf16.msra.mxu0 %v1314
      %1364 = vmatpush.bf16.msra.mxu0 %v1313
      %1365 = vmatpush.bf16.msra.mxu0 %v1312
      %1366 = vmatmul.bf16.gmra.mxu0 %v1322
      %v1367 = vpop.f32.mrf.mxu0
      %v1368 = vadd.f32 0.0, %v1367
      %v1369 = vpop.f32.mrf.mxu0
      %v1370 = vadd.f32 0.0, %v1369
      %1371 = vmatmul.bf16.gmra.mxu0 %v1324
      %v1372 = vpop.f32.mrf.mxu0
      %v1373 = vadd.f32 0.0, %v1372
      %v1374 = vpop.f32.mrf.mxu0
      %v1375 = vadd.f32 0.0, %v1374
      %1376 = vmatmul.bf16.gmra.mxu0 %v1326
      %v1377 = vpop.f32.mrf.mxu0
      %v1378 = vadd.f32 0.0, %v1377
      %v1379 = vpop.f32.mrf.mxu0
      %v1380 = vadd.f32 0.0, %v1379
      %1381 = vmatmul.bf16.gmra.mxu0 %v1328
      %v1382 = vpop.f32.mrf.mxu0
      %v1383 = vadd.f32 0.0, %v1382
      %v1384 = vpop.f32.mrf.mxu0
      %v1385 = vadd.f32 0.0, %v1384
      %1386 = vmatmul.bf16.gmra.mxu0 %v1330
      %v1387 = vpop.f32.mrf.mxu0
      %v1388 = vadd.f32 0.0, %v1387
      %v1389 = vpop.f32.mrf.mxu0
      %v1390 = vadd.f32 0.0, %v1389
      %1391 = vmatmul.bf16.gmra.mxu0 %v1332
      %v1392 = vpop.f32.mrf.mxu0
      %v1393 = vadd.f32 0.0, %v1392
      %v1394 = vpop.f32.mrf.mxu0
      %v1395 = vadd.f32 0.0, %v1394
      %1396 = vmatmul.bf16.gmra.mxu0 %v1334
      %v1397 = vpop.f32.mrf.mxu0
      %v1398 = vadd.f32 0.0, %v1397
      %v1399 = vpop.f32.mrf.mxu0
      %v1400 = vadd.f32 0.0, %v1399
      %1401 = vmatmul.bf16.gmra.mxu0 %v1336
      %v1402 = vpop.f32.mrf.mxu0
      %v1403 = vadd.f32 0.0, %v1402
      %v1404 = vpop.f32.mrf.mxu0
      %v1405 = vadd.f32 0.0, %v1404
      %1406 = vmatmul.bf16.gmra.mxu0 %v1338
      %v1407 = vpop.f32.mrf.mxu0
      %v1408 = vadd.f32 0.0, %v1407
      %v1409 = vpop.f32.mrf.mxu0
      %v1410 = vadd.f32 0.0, %v1409
      %1411 = vmatmul.bf16.gmra.mxu0 %v1340
      %v1412 = vpop.f32.mrf.mxu0
      %v1413 = vadd.f32 0.0, %v1412
      %v1414 = vpop.f32.mrf.mxu0
      %v1415 = vadd.f32 0.0, %v1414
      %1416 = vmatmul.bf16.gmra.mxu0 %v1342
      %v1417 = vpop.f32.mrf.mxu0
      %v1418 = vadd.f32 0.0, %v1417
      %v1419 = vpop.f32.mrf.mxu0
      %v1420 = vadd.f32 0.0, %v1419
      %1421 = vmatmul.bf16.gmra.mxu0 %v1344
      %v1422 = vpop.f32.mrf.mxu0
      %v1423 = vadd.f32 0.0, %v1422
      %v1424 = vpop.f32.mrf.mxu0
      %v1425 = vadd.f32 0.0, %v1424
      %1426 = vmatmul.bf16.gmra.mxu0 %v1346
      %v1427 = vpop.f32.mrf.mxu0
      %v1428 = vadd.f32 0.0, %v1427
      %v1429 = vpop.f32.mrf.mxu0
      %v1430 = vadd.f32 0.0, %v1429
      %1431 = vmatmul.bf16.gmra.mxu0 %v1348
      %v1432 = vpop.f32.mrf.mxu0
      %v1433 = vadd.f32 0.0, %v1432
      %v1434 = vpop.f32.mrf.mxu0
      %v1435 = vadd.f32 0.0, %v1434
      %1436 = vmatmul.bf16.gmra.mxu0 %v1350
      %v1437 = vpop.f32.mrf.mxu0
      %v1438 = vadd.f32 0.0, %v1437
      %v1439 = vpop.f32.mrf.mxu0
      %v1440 = vadd.f32 0.0, %v1439
      %1441 = vmatmul.bf16.gmra.mxu0 %v1352
      %v1442 = vpop.f32.mrf.mxu0
      %v1443 = vadd.f32 0.0, %v1442
      %v1444 = vpop.f32.mrf.mxu0
      %v1445 = vadd.f32 0.0, %v1444
      %1446 = vdwg.mxu0
      %v1447 = vld [vmem:[%s278] sm:$0x1]
      %v1449 = vperm.slane %v1447, 0
      %v1451 = vmul.f32 %v1368, %v1449
      %v1452 = vmul.f32 %v1370, %v1449
      %v1453 = vmul.f32 %v1373, %v1449
      %v1454 = vmul.f32 %v1375, %v1449
      %v1455 = vmul.f32 %v1378, %v1449
      %v1456 = vmul.f32 %v1380, %v1449
      %v1457 = vmul.f32 %v1383, %v1449
      %v1458 = vmul.f32 %v1385, %v1449
      %v1459 = vmul.f32 %v1388, %v1449
      %v1460 = vmul.f32 %v1390, %v1449
      %v1461 = vmul.f32 %v1393, %v1449
      %v1462 = vmul.f32 %v1395, %v1449
      %v1463 = vmul.f32 %v1398, %v1449
      %v1464 = vmul.f32 %v1400, %v1449
      %v1465 = vmul.f32 %v1403, %v1449
      %v1466 = vmul.f32 %v1405, %v1449
      %v1467 = vmul.f32 %v1408, %v1449
      %v1468 = vmul.f32 %v1410, %v1449
      %v1469 = vmul.f32 %v1413, %v1449
      %v1470 = vmul.f32 %v1415, %v1449
      %v1471 = vmul.f32 %v1418, %v1449
      %v1472 = vmul.f32 %v1420, %v1449
      %v1473 = vmul.f32 %v1423, %v1449
      %v1474 = vmul.f32 %v1425, %v1449
      %v1475 = vmul.f32 %v1428, %v1449
      %v1476 = vmul.f32 %v1430, %v1449
      %v1477 = vmul.f32 %v1433, %v1449
      %v1478 = vmul.f32 %v1435, %v1449
      %v1479 = vmul.f32 %v1438, %v1449
      %v1480 = vmul.f32 %v1440, %v1449
      %v1481 = vmul.f32 %v1443, %v1449
      %v1482 = vmul.f32 %v1445, %v1449
      %v1483 = vld [vmem:[%s281] sm:$0x1]
      %v1485 = vperm.slane %v1483, 0
      %v1487 = vadd.f32 %v1451, %v1485
      %v1488 = vadd.f32 %v1452, %v1485
      %v1489 = vadd.f32 %v1453, %v1485
      %v1490 = vadd.f32 %v1454, %v1485
      %v1491 = vadd.f32 %v1455, %v1485
      %v1492 = vadd.f32 %v1456, %v1485
      %v1493 = vadd.f32 %v1457, %v1485
      %v1494 = vadd.f32 %v1458, %v1485
      %v1495 = vadd.f32 %v1459, %v1485
      %v1496 = vadd.f32 %v1460, %v1485
      %v1497 = vadd.f32 %v1461, %v1485
      %v1498 = vadd.f32 %v1462, %v1485
      %v1499 = vadd.f32 %v1463, %v1485
      %v1500 = vadd.f32 %v1464, %v1485
      %v1501 = vadd.f32 %v1465, %v1485
      %v1502 = vadd.f32 %v1466, %v1485
      %v1503 = vadd.f32 %v1467, %v1485
      %v1504 = vadd.f32 %v1468, %v1485
      %v1505 = vadd.f32 %v1469, %v1485
      %v1506 = vadd.f32 %v1470, %v1485
      %v1507 = vadd.f32 %v1471, %v1485
      %v1508 = vadd.f32 %v1472, %v1485
      %v1509 = vadd.f32 %v1473, %v1485
      %v1510 = vadd.f32 %v1474, %v1485
      %v1511 = vadd.f32 %v1475, %v1485
      %v1512 = vadd.f32 %v1476, %v1485
      %v1513 = vadd.f32 %v1477, %v1485
      %v1514 = vadd.f32 %v1478, %v1485
      %v1515 = vadd.f32 %v1479, %v1485
      %v1516 = vadd.f32 %v1480, %v1485
      %v1517 = vadd.f32 %v1481, %v1485
      %v1518 = vadd.f32 %v1482, %v1485
      %v1519 = vsub.f32 0.0, %v1487
      %v1520 = vsub.f32 0.0, %v1488
      %v1521 = vsub.f32 0.0, %v1489
      %v1522 = vsub.f32 0.0, %v1490
      %v1523 = vsub.f32 0.0, %v1491
      %v1524 = vsub.f32 0.0, %v1492
      %v1525 = vsub.f32 0.0, %v1493
      %v1526 = vsub.f32 0.0, %v1494
      %v1527 = vsub.f32 0.0, %v1495
      %v1528 = vsub.f32 0.0, %v1496
      %v1529 = vsub.f32 0.0, %v1497
      %v1530 = vsub.f32 0.0, %v1498
      %v1531 = vsub.f32 0.0, %v1499
      %v1532 = vsub.f32 0.0, %v1500
      %v1533 = vsub.f32 0.0, %v1501
      %v1534 = vsub.f32 0.0, %v1502
      %v1535 = vsub.f32 0.0, %v1503
      %v1536 = vsub.f32 0.0, %v1504
      %v1537 = vsub.f32 0.0, %v1505
      %v1538 = vsub.f32 0.0, %v1506
      %v1539 = vsub.f32 0.0, %v1507
      %v1540 = vsub.f32 0.0, %v1508
      %v1541 = vsub.f32 0.0, %v1509
      %v1542 = vsub.f32 0.0, %v1510
      %v1543 = vsub.f32 0.0, %v1511
      %v1544 = vsub.f32 0.0, %v1512
      %v1545 = vsub.f32 0.0, %v1513
      %v1546 = vsub.f32 0.0, %v1514
      %v1547 = vsub.f32 0.0, %v1515
      %v1548 = vsub.f32 0.0, %v1516
      %v1549 = vsub.f32 0.0, %v1517
      %v1550 = vsub.f32 0.0, %v1518
      %v1551 = vmul.f32 %v1519, 1.442695
      %v1552 = vpow.pop %v1551
      %v1553 = vmul.f32 %v1520, 1.442695
      %v1554 = vpow.pop %v1553
      %v1555 = vmul.f32 %v1521, 1.442695
      %v1556 = vpow.pop %v1555
      %v1557 = vmul.f32 %v1522, 1.442695
      %v1558 = vpow.pop %v1557
      %v1559 = vmul.f32 %v1523, 1.442695
      %v1560 = vpow.pop %v1559
      %v1561 = vmul.f32 %v1524, 1.442695
      %v1562 = vpow.pop %v1561
      %v1563 = vmul.f32 %v1525, 1.442695
      %v1564 = vpow.pop %v1563
      %v1565 = vmul.f32 %v1526, 1.442695
      %v1566 = vpow.pop %v1565
      %v1567 = vmul.f32 %v1527, 1.442695
      %v1568 = vpow.pop %v1567
      %v1569 = vmul.f32 %v1528, 1.442695
      %v1570 = vpow.pop %v1569
      %v1571 = vmul.f32 %v1529, 1.442695
      %v1572 = vpow.pop %v1571
      %v1573 = vmul.f32 %v1530, 1.442695
      %v1574 = vpow.pop %v1573
      %v1575 = vmul.f32 %v1531, 1.442695
      %v1576 = vpow.pop %v1575
      %v1577 = vmul.f32 %v1532, 1.442695
      %v1578 = vpow.pop %v1577
      %v1579 = vmul.f32 %v1533, 1.442695
      %v1580 = vpow.pop %v1579
      %v1581 = vmul.f32 %v1534, 1.442695
      %v1582 = vpow.pop %v1581
      %v1583 = vmul.f32 %v1535, 1.442695
      %v1584 = vpow.pop %v1583
      %v1585 = vmul.f32 %v1536, 1.442695
      %v1586 = vpow.pop %v1585
      %v1587 = vmul.f32 %v1537, 1.442695
      %v1588 = vpow.pop %v1587
      %v1589 = vmul.f32 %v1538, 1.442695
      %v1590 = vpow.pop %v1589
      %v1591 = vmul.f32 %v1539, 1.442695
      %v1592 = vpow.pop %v1591
      %v1593 = vmul.f32 %v1540, 1.442695
      %v1594 = vpow.pop %v1593
      %v1595 = vmul.f32 %v1541, 1.442695
      %v1596 = vpow.pop %v1595
      %v1597 = vmul.f32 %v1542, 1.442695
      %v1598 = vpow.pop %v1597
      %v1599 = vmul.f32 %v1543, 1.442695
      %v1600 = vpow.pop %v1599
      %v1601 = vmul.f32 %v1544, 1.442695
      %v1602 = vpow.pop %v1601
      %v1603 = vmul.f32 %v1545, 1.442695
      %v1604 = vpow.pop %v1603
      %v1605 = vmul.f32 %v1546, 1.442695
      %v1606 = vpow.pop %v1605
      %v1607 = vmul.f32 %v1547, 1.442695
      %v1608 = vpow.pop %v1607
      %v1609 = vmul.f32 %v1548, 1.442695
      %v1610 = vpow.pop %v1609
      %v1611 = vmul.f32 %v1549, 1.442695
      %v1612 = vpow.pop %v1611
      %v1613 = vmul.f32 %v1550, 1.442695
      %v1614 = vpow.pop %v1613
      %v1615 = vadd.f32 %v1552, 1.0
      %v1616 = vadd.f32 %v1554, 1.0
      %v1617 = vadd.f32 %v1556, 1.0
      %v1618 = vadd.f32 %v1558, 1.0
      %v1619 = vadd.f32 %v1560, 1.0
      %v1620 = vadd.f32 %v1562, 1.0
      %v1621 = vadd.f32 %v1564, 1.0
      %v1622 = vadd.f32 %v1566, 1.0
      %v1623 = vadd.f32 %v1568, 1.0
      %v1624 = vadd.f32 %v1570, 1.0
      %v1625 = vadd.f32 %v1572, 1.0
      %v1626 = vadd.f32 %v1574, 1.0
      %v1627 = vadd.f32 %v1576, 1.0
      %v1628 = vadd.f32 %v1578, 1.0
      %v1629 = vadd.f32 %v1580, 1.0
      %v1630 = vadd.f32 %v1582, 1.0
      %v1631 = vadd.f32 %v1584, 1.0
      %v1632 = vadd.f32 %v1586, 1.0
      %v1633 = vadd.f32 %v1588, 1.0
      %v1634 = vadd.f32 %v1590, 1.0
      %v1635 = vadd.f32 %v1592, 1.0
      %v1636 = vadd.f32 %v1594, 1.0
      %v1637 = vadd.f32 %v1596, 1.0
      %v1638 = vadd.f32 %v1598, 1.0
      %v1639 = vadd.f32 %v1600, 1.0
      %v1640 = vadd.f32 %v1602, 1.0
      %v1641 = vadd.f32 %v1604, 1.0
      %v1642 = vadd.f32 %v1606, 1.0
      %v1643 = vadd.f32 %v1608, 1.0
      %v1644 = vadd.f32 %v1610, 1.0
      %v1645 = vadd.f32 %v1612, 1.0
      %v1646 = vadd.f32 %v1614, 1.0
      %v1647 = vrcp.pop %v1615
      %v1648 = vrcp.pop %v1616
      %v1649 = vrcp.pop %v1617
      %v1650 = vrcp.pop %v1618
      %v1651 = vrcp.pop %v1619
      %v1652 = vrcp.pop %v1620
      %v1653 = vrcp.pop %v1621
      %v1654 = vrcp.pop %v1622
      %v1655 = vrcp.pop %v1623
      %v1656 = vrcp.pop %v1624
      %v1657 = vrcp.pop %v1625
      %v1658 = vrcp.pop %v1626
      %v1659 = vrcp.pop %v1627
      %v1660 = vrcp.pop %v1628
      %v1661 = vrcp.pop %v1629
      %v1662 = vrcp.pop %v1630
      %v1663 = vrcp.pop %v1631
      %v1664 = vrcp.pop %v1632
      %v1665 = vrcp.pop %v1633
      %v1666 = vrcp.pop %v1634
      %v1667 = vrcp.pop %v1635
      %v1668 = vrcp.pop %v1636
      %v1669 = vrcp.pop %v1637
      %v1670 = vrcp.pop %v1638
      %v1671 = vrcp.pop %v1639
      %v1672 = vrcp.pop %v1640
      %v1673 = vrcp.pop %v1641
      %v1674 = vrcp.pop %v1642
      %v1675 = vrcp.pop %v1643
      %v1676 = vrcp.pop %v1644
      %v1677 = vrcp.pop %v1645
      %v1678 = vrcp.pop %v1646
      %v1679 = vmul.f32 %v1487, %v1647
      %v1680 = vmul.f32 %v1488, %v1648
      %v1681 = vmul.f32 %v1489, %v1649
      %v1682 = vmul.f32 %v1490, %v1650
      %v1683 = vmul.f32 %v1491, %v1651
      %v1684 = vmul.f32 %v1492, %v1652
      %v1685 = vmul.f32 %v1493, %v1653
      %v1686 = vmul.f32 %v1494, %v1654
      %v1687 = vmul.f32 %v1495, %v1655
      %v1688 = vmul.f32 %v1496, %v1656
      %v1689 = vmul.f32 %v1497, %v1657
      %v1690 = vmul.f32 %v1498, %v1658
      %v1691 = vmul.f32 %v1499, %v1659
      %v1692 = vmul.f32 %v1500, %v1660
      %v1693 = vmul.f32 %v1501, %v1661
      %v1694 = vmul.f32 %v1502, %v1662
      %v1695 = vmul.f32 %v1503, %v1663
      %v1696 = vmul.f32 %v1504, %v1664
      %v1697 = vmul.f32 %v1505, %v1665
      %v1698 = vmul.f32 %v1506, %v1666
      %v1699 = vmul.f32 %v1507, %v1667
      %v1700 = vmul.f32 %v1508, %v1668
      %v1701 = vmul.f32 %v1509, %v1669
      %v1702 = vmul.f32 %v1510, %v1670
      %v1703 = vmul.f32 %v1511, %v1671
      %v1704 = vmul.f32 %v1512, %v1672
      %v1705 = vmul.f32 %v1513, %v1673
      %v1706 = vmul.f32 %v1514, %v1674
      %v1707 = vmul.f32 %v1515, %v1675
      %v1708 = vmul.f32 %v1516, %v1676
      %v1709 = vmul.f32 %v1517, %v1677
      %v1710 = vmul.f32 %v1518, %v1678
      %1711 = vst [vmem:[%s293] sm:$0xff] %v1679
      %1712 = vst [vmem:[%s293 + $0x8] sm:$0xff] %v1680
      %1713 = vst [vmem:[%s293 + $0x10] sm:$0xff] %v1681
      %1714 = vst [vmem:[%s293 + $0x18] sm:$0xff] %v1682
      %1715 = vst [vmem:[%s293 + $0x20] sm:$0xff] %v1683
      %1716 = vst [vmem:[%s293 + $0x28] sm:$0xff] %v1684
      %1717 = vst [vmem:[%s293 + $0x30] sm:$0xff] %v1685
      %1718 = vst [vmem:[%s293 + $0x38] sm:$0xff] %v1686
      %1719 = vst [vmem:[%s293 + $0x40] sm:$0xff] %v1687
      %1720 = vst [vmem:[%s293 + $0x48] sm:$0xff] %v1688
      %1721 = vst [vmem:[%s293 + $0x50] sm:$0xff] %v1689
      %1722 = vst [vmem:[%s293 + $0x58] sm:$0xff] %v1690
      %1723 = vst [vmem:[%s293 + $0x60] sm:$0xff] %v1691
      %1724 = vst [vmem:[%s293 + $0x68] sm:$0xff] %v1692
      %1725 = vst [vmem:[%s293 + $0x70] sm:$0xff] %v1693
      %1726 = vst [vmem:[%s293 + $0x78] sm:$0xff] %v1694
      %1727 = vst [vmem:[%s293 + $0x80] sm:$0xff] %v1695
      %1728 = vst [vmem:[%s293 + $0x88] sm:$0xff] %v1696
      %1729 = vst [vmem:[%s293 + $0x90] sm:$0xff] %v1697
      %1730 = vst [vmem:[%s293 + $0x98] sm:$0xff] %v1698
      %1731 = vst [vmem:[%s293 + $0xa0] sm:$0xff] %v1699
      %1732 = vst [vmem:[%s293 + $0xa8] sm:$0xff] %v1700
      %1733 = vst [vmem:[%s293 + $0xb0] sm:$0xff] %v1701
      %1734 = vst [vmem:[%s293 + $0xb8] sm:$0xff] %v1702
      %1735 = vst [vmem:[%s293 + $0xc0] sm:$0xff] %v1703
      %1736 = vst [vmem:[%s293 + $0xc8] sm:$0xff] %v1704
      %1737 = vst [vmem:[%s293 + $0xd0] sm:$0xff] %v1705
      %1738 = vst [vmem:[%s293 + $0xd8] sm:$0xff] %v1706
      %1739 = vst [vmem:[%s293 + $0xe0] sm:$0xff] %v1707
      %1740 = vst [vmem:[%s293 + $0xe8] sm:$0xff] %v1708
      %1741 = vst [vmem:[%s293 + $0xf0] sm:$0xff] %v1709
      %1742 = vst [vmem:[%s293 + $0xf8] sm:$0xff] %v1710
      %p1743 = scmp.lt.s32.totalorder %s20, 1
      %s1744 = scalar_select %p1743, %s20, 1
      %p1745 = scmp.lt.s32.totalorder %s21, 0
      %s1746 = scalar_select %p1745, %s21, 0
      %p1747 = scmp.lt.s32.totalorder %s22, 0
      %s1748 = scalar_select %p1747, %s22, 0
      %s1749 = smul.addr %s1746, 32
      %s1750 = sadd.s32 %s1748, %s1749
      %s1751 = smul.addr %s1744, 32
      %s1752 = sadd.s32 %s1750, %s1751
      %s1753 = smul.addr %s1752, 8
      %s1754 = scalar_lea.vmem %s4, %s1753
      // Predicated region
      $region37: #{a_call__.1} parent=35 // pred_check
        %p1755 = pneg %p162
      $region38: #{a_call__.1} parent=35 // pred_check_branch
        %1757 = sbr.rel (%p1755) target = $region40
      $region39: #{a_call__.1} parent=35 // pred_region
        _
      $region40: #{a_call__.1} parent=35 // pred_fallthru
        _
    $region36: #{a_call__.1} parent=5 // pred_fallthru
      _
    %p1758 = scmp.le.s32.totalorder 2, %s10
    // Predicated region
    $region41: #{a_call__.1} parent=5 // pred_check
      %p1759 = pneg %p1758
    $region42: #{a_call__.1} parent=5 // pred_check_branch
      %1761 = sbr.rel (%p1759) target = $region44
    $region43: #{a_call__.1} parent=5 // pred_region
      %s1762 = ssub.s32 %s10, 2
      // Predicated region
      $region45: #{a_call__.1} parent=43 // pred_check
        %p1763 = pneg %p168
      $region46: #{a_call__.1} parent=43 // pred_check_branch
        %1765 = sbr.rel (%p1763) target = $region48
      $region47: #{a_call__.1} parent=43 // pred_region
        %p1766 = scmp.lt.s32.totalorder %s23, 1
        %s1767 = scalar_select %p1766, %s23, 1
        %p1768 = scmp.lt.s32.totalorder %s24, 0
        %s1769 = scalar_select %p1768, %s24, 0
        %p1770 = scmp.lt.s32.totalorder %s25, 0
        %s1771 = scalar_select %p1770, %s25, 0
        %s1772 = smul.addr %s1769, 32
        %s1773 = sadd.s32 %s1771, %s1772
        %s1774 = smul.addr %s1767, 32
        %s1775 = sadd.s32 %s1773, %s1774
        %s1776 = smul.addr %s1775, 8
        %s1777 = scalar_lea.vmem %s4, %s1776
      $region48: #{a_call__.1} parent=43 // pred_fallthru
        _
    $region44: #{a_call__.1} parent=5 // pred_fallthru
      _
  $region6: #{a_call__.1} parent=0 // loop_footer
    %s14 = sadd.s32 1, %s10
  $region7: #{a_call__.1} parent=0 // loop_footer_branch
    %9 = sbr.rel target = $region3
  $region8: #{a_call__.1} parent=0 // loop_exit
    _

</llo_original>
